<compile_context>
chip_gen: v5e
topology: v5e:2x2
jax: 0.10.0
libtpu: 0.0.40
codegen_flags: <defaults>
</compile_context>

<pallas_src>
import functools
import math

import jax
import jax.numpy as jnp
from jax import lax
from jax.experimental import pallas as pl
from jax.experimental.pallas import tpu as pltpu


def _layer_norm(x, gamma, beta, eps=1e-5):
    mean = jnp.mean(x, axis=-1, keepdims=True)
    var = jnp.mean((x - mean) ** 2, axis=-1, keepdims=True)
    return (x - mean) * lax.rsqrt(var + eps) * gamma + beta


def cross_attention_kernel(
    xq_ref, xkv_ref,
    qn_g_ref, qn_b_ref, kvn_g_ref, kvn_b_ref,
    wq_ref, bq_ref, wk_ref, bk_ref, wv_ref, bv_ref, wp_ref, bp_ref,
    out_ref,
    *, heads, qk_head_dim, v_head_dim,
):
    b_blk, lq, dq = xq_ref.shape
    _, lkv, dkv = xkv_ref.shape
    mxu_dtype = wq_ref.dtype          # bf16 weights => bf16 MXU operands

    # Flatten the batch block so LayerNorm + projections see b_blk*L rows
    # (fills MXU sublanes, amortizes per-step overhead).
    xq = xq_ref[...].reshape(b_blk * lq, dq).astype(jnp.float32)
    xkv = xkv_ref[...].reshape(b_blk * lkv, dkv).astype(jnp.float32)

    # LayerNorms in f32 (v5e has no bf16 VPU/EUP path).
    xq_n = _layer_norm(xq, qn_g_ref[...].astype(jnp.float32),
                       qn_b_ref[...].astype(jnp.float32))
    xkv_n = _layer_norm(xkv, kvn_g_ref[...].astype(jnp.float32),
                        kvn_b_ref[...].astype(jnp.float32))

    # Q/K/V projections: big (b_blk*L, D) @ (D, out) MXU matmuls, f32 accum.
    q = jnp.dot(xq_n.astype(mxu_dtype), wq_ref[...],
                preferred_element_type=jnp.float32) + bq_ref[...].astype(jnp.float32)
    k = jnp.dot(xkv_n.astype(mxu_dtype), wk_ref[...],
                preferred_element_type=jnp.float32) + bk_ref[...].astype(jnp.float32)
    v = jnp.dot(xkv_n.astype(mxu_dtype), wv_ref[...],
                preferred_element_type=jnp.float32) + bv_ref[...].astype(jnp.float32)

    # Pre-scale Q (bias included) in f32 — equivalent to dividing the scores.
    q = q * (1.0 / math.sqrt(qk_head_dim))

    # Cast once for the MXU; reshapes only split the leading (sublane) axis,
    # the lane axis stays untouched.
    q3 = q.astype(mxu_dtype).reshape(b_blk, lq, heads * qk_head_dim)
    k3 = k.astype(mxu_dtype).reshape(b_blk, lkv, heads * qk_head_dim)
    v3 = v.astype(mxu_dtype).reshape(b_blk, lkv, heads * v_head_dim)

    wp = wp_ref[...]
    acc = jnp.broadcast_to(bp_ref[...].astype(jnp.float32), (b_blk, lq, dq))

    # TODO(synk): optional attention_mask (masked_fill with -1e20) not wired;
    # the reference path uses attention_mask=None. Dropout (p=0/eval) is a no-op.
    # TODO(synk): for Perceiver-scale Lkv, add a KV grid axis ("arbitrary")
    # with online-softmax (m, l, acc) VMEM scratch instead of full-Lkv blocks.
    for h in range(heads):                        # static, compile-time unrolled
        qh = q3[:, :, h * qk_head_dim:(h + 1) * qk_head_dim]
        kh = k3[:, :, h * qk_head_dim:(h + 1) * qk_head_dim]
        vh = v3[:, :, h * v_head_dim:(h + 1) * v_head_dim]
        # q @ k^T batched over b_blk, contracting the LAST axes (no transpose).
        s = lax.dot_general(
            qh, kh,
            dimension_numbers=(((2,), (2,)), ((0,), (0,))),
            preferred_element_type=jnp.float32)
        s = s - jnp.max(s, axis=-1, keepdims=True)
        p = jnp.exp(s)
        p = p * pl.reciprocal(jnp.sum(p, axis=-1, keepdims=True), approx=True)
        oh = lax.dot_general(
            p.astype(mxu_dtype), vh,
            dimension_numbers=(((2,), (1,)), ((0,), (0,))),
            preferred_element_type=jnp.float32)
        # Output projection folded into the head loop: no lane-axis concat,
        # just K-sliced MXU accumulates into (b_blk, lq, dq).
        acc = acc + lax.dot_general(
            oh.astype(mxu_dtype), wp[h * v_head_dim:(h + 1) * v_head_dim, :],
            dimension_numbers=(((2,), (0,)), ((), ())),
            preferred_element_type=jnp.float32)

    out_ref[...] = acc.astype(out_ref.dtype)


def cross_attention(x_q, x_kv, params, *, heads, b_blk=None):
    B, Lq, Dq = x_q.shape
    _, Lkv, Dkv = x_kv.shape
    qk_out = params["wq"].shape[1]
    v_out = params["wv"].shape[1]
    qk_head_dim = qk_out // heads
    v_head_dim = v_out // heads

    if b_blk is None:
        # Enough rows per step to fill MXU sublanes (~128), but keep >=2 grid
        # steps when possible so v7x's two TensorCores both get work.
        b_blk = max(1, min(B, pl.cdiv(128, Lq)))
        if B > 1 and pl.cdiv(B, b_blk) < 2:
            b_blk = max(1, pl.cdiv(B, 2))

    Bp = pl.cdiv(B, b_blk) * b_blk
    if Bp != B:
        pad = Bp - B
        x_q = jnp.pad(x_q, ((0, pad), (0, 0), (0, 0)))
        x_kv = jnp.pad(x_kv, ((0, pad), (0, 0), (0, 0)))

    kernel = functools.partial(
        cross_attention_kernel,
        heads=heads, qk_head_dim=qk_head_dim, v_head_dim=v_head_dim,
    )

    def whole(arr):
        # Grid-invariant block: same (0,...) index each step => fetched once.
        zeros = (0,) * arr.ndim
        return pl.BlockSpec(arr.shape, lambda g: zeros)

    grid_spec = pltpu.PrefetchScalarGridSpec(
        num_scalar_prefetch=0,
        grid=(Bp // b_blk,),
        in_specs=[
            pl.BlockSpec((b_blk, Lq, Dq), lambda g: (g, 0, 0)),
            pl.BlockSpec((b_blk, Lkv, Dkv), lambda g: (g, 0, 0)),
            whole(params["qn_g"]), whole(params["qn_b"]),
            whole(params["kvn_g"]), whole(params["kvn_b"]),
            whole(params["wq"]), whole(params["bq"]),
            whole(params["wk"]), whole(params["bk"]),
            whole(params["wv"]), whole(params["bv"]),
            whole(params["wp"]), whole(params["bp"]),
        ],
        out_specs=pl.BlockSpec((b_blk, Lq, Dq), lambda g: (g, 0, 0)),
    )

    out = pl.pallas_call(
        kernel,
        out_shape=jax.ShapeDtypeStruct((Bp, Lq, Dq), x_q.dtype),
        grid_spec=grid_spec,
        compiler_params=pltpu.CompilerParams(
            dimension_semantics=("parallel",),
            vmem_limit_bytes=32 * 1024 * 1024,
        ),
    )(
        x_q, x_kv,
        params["qn_g"], params["qn_b"], params["kvn_g"], params["kvn_b"],
        params["wq"], params["bq"], params["wk"], params["bk"],
        params["wv"], params["bv"], params["wp"], params["bp"],
    )
    return out[:B]


def cross_attention_reference(x_q, x_kv, params, *, heads):
    """Plain-JAX replica of the PyTorch forward (dropout=0, no mask)."""
    def ln(x, g, b, eps=1e-5):
        m = jnp.mean(x, axis=-1, keepdims=True)
        v = jnp.mean((x - m) ** 2, axis=-1, keepdims=True)
        return (x - m) / jnp.sqrt(v + eps) * g + b

    xq = ln(x_q, params["qn_g"], params["qn_b"])
    xkv = ln(x_kv, params["kvn_g"], params["kvn_b"])

    q = xq @ params["wq"] + params["bq"]
    k = xkv @ params["wk"] + params["bk"]
    v = xkv @ params["wv"] + params["bv"]

    B, Lq, _ = x_q.shape
    Lkv = x_kv.shape[1]
    dqk = params["wq"].shape[1] // heads
    dv = params["wv"].shape[1] // heads
    q = q.reshape(B, Lq, heads, dqk)
    k = k.reshape(B, Lkv, heads, dqk)
    v = v.reshape(B, Lkv, heads, dv)

    energy = jnp.einsum("nqhd,nkhd->nhqk", q, k)
    attn = jax.nn.softmax(energy / math.sqrt(dqk), axis=3)
    out = jnp.einsum("nhql,nlhd->nqhd", attn, v).reshape(B, Lq, heads * dv)
    return out @ params["wp"] + params["bp"]


def init_params(key, q_dim, kv_dim, qk_out_dim, v_out_dim):
    """Deterministic synthetic init. Linear weights stored TRANSPOSED: (in, out)."""
    ks = jax.random.split(key, 8)

    def lin(k, din, dout):
        kw, kb = jax.random.split(k)
        bound = 1.0 / math.sqrt(din)
        w = jax.random.uniform(kw, (din, dout), jnp.float32, -bound, bound)
        b = jax.random.uniform(kb, (1, dout), jnp.float32, -bound, bound)
        return w, b

    wq, bq = lin(ks[0], q_dim, qk_out_dim)
    wk, bk = lin(ks[1], kv_dim, qk_out_dim)
    wv, bv = lin(ks[2], kv_dim, v_out_dim)
    wp, bp = lin(ks[3], v_out_dim, q_dim)  # output_dim == q_dim in CrossAttention
    return dict(
        qn_g=jnp.ones((1, q_dim), jnp.float32), qn_b=jnp.zeros((1, q_dim), jnp.float32),
        kvn_g=jnp.ones((1, kv_dim), jnp.float32), kvn_b=jnp.zeros((1, kv_dim), jnp.float32),
        wq=wq, bq=bq, wk=wk, bk=bk, wv=wv, bv=bv, wp=wp, bp=bp,
    )


if __name__ == "__main__":
    B, Lq, Lkv = 2, 8, 16
    q_dim, kv_dim = 32, 32
    qk_out_dim, v_out_dim = 32, 32
    heads = 4

    key = jax.random.PRNGKey(0)
    kq, kkv, kp = jax.random.split(key, 3)
    x_q = jax.random.normal(kq, (B, Lq, q_dim), jnp.float32)
    x_kv = jax.random.normal(kkv, (B, Lkv, kv_dim), jnp.float32)
    params = init_params(kp, q_dim, kv_dim, qk_out_dim, v_out_dim)

    ref = cross_attention_reference(x_q, x_kv, params, heads=heads)

    # Default blocking (2 grid steps here -> megacore-friendly on v7x).
    out = jax.block_until_ready(cross_attention(x_q, x_kv, params, heads=heads))
    # Batched-rows path (b_blk=2 -> one step, flattened 16-row projections).
    out2 = jax.block_until_ready(
        cross_attention(x_q, x_kv, params, heads=heads, b_blk=2))

    assert out.shape == (B, Lq, q_dim)
    # Tolerance 5e-3 because of the approx softmax reciprocal
    # (pl.reciprocal(approx=True)); still far below any real bug.
    assert jnp.allclose(out, ref, atol=5e-3, rtol=5e-3), "mismatch vs reference"
    assert jnp.allclose(out2, ref, atol=5e-3, rtol=5e-3), "mismatch vs reference (b_blk=2)"

    print("KERNEL_OK")
</pallas_src>

<mosaic_0001>
module attributes {stable_mosaic.version = 11 : i64} {
  func.func @cross_attention_kernel(%arg0: i32, %arg1: memref<1x8x32xf32, #tpu.memory_space<vmem>>, %arg2: memref<1x16x32xf32, #tpu.memory_space<vmem>>, %arg3: memref<1x32xf32, #tpu.memory_space<vmem>>, %arg4: memref<1x32xf32, #tpu.memory_space<vmem>>, %arg5: memref<1x32xf32, #tpu.memory_space<vmem>>, %arg6: memref<1x32xf32, #tpu.memory_space<vmem>>, %arg7: memref<32x32xf32, #tpu.memory_space<vmem>>, %arg8: memref<1x32xf32, #tpu.memory_space<vmem>>, %arg9: memref<32x32xf32, #tpu.memory_space<vmem>>, %arg10: memref<1x32xf32, #tpu.memory_space<vmem>>, %arg11: memref<32x32xf32, #tpu.memory_space<vmem>>, %arg12: memref<1x32xf32, #tpu.memory_space<vmem>>, %arg13: memref<32x32xf32, #tpu.memory_space<vmem>>, %arg14: memref<1x32xf32, #tpu.memory_space<vmem>>, %arg15: memref<1x8x32xf32, #tpu.memory_space<vmem>>) attributes {dimension_semantics = [#tpu.dimension_semantics<parallel>], iteration_bounds = array<i64: 2>, scalar_prefetch = 0 : i64, scratch_operands = 0 : i64, tpu.core_type = #tpu.core_type<tc>, window_params = [{transform_indices = @transform_0, window_bounds = array<i64: 1, 8, 32>}, {transform_indices = @transform_1, window_bounds = array<i64: 1, 16, 32>}, {pipeline_mode = #tpu.pipeline_mode<synchronous>, transform_indices = @transform_2, window_bounds = array<i64: 1, 32>}, {pipeline_mode = #tpu.pipeline_mode<synchronous>, transform_indices = @transform_3, window_bounds = array<i64: 1, 32>}, {pipeline_mode = #tpu.pipeline_mode<synchronous>, transform_indices = @transform_4, window_bounds = array<i64: 1, 32>}, {pipeline_mode = #tpu.pipeline_mode<synchronous>, transform_indices = @transform_5, window_bounds = array<i64: 1, 32>}, {pipeline_mode = #tpu.pipeline_mode<synchronous>, transform_indices = @transform_6, window_bounds = array<i64: 32, 32>}, {pipeline_mode = #tpu.pipeline_mode<synchronous>, transform_indices = @transform_7, window_bounds = array<i64: 1, 32>}, {pipeline_mode = #tpu.pipeline_mode<synchronous>, transform_indices = @transform_8, window_bounds = array<i64: 32, 32>}, {pipeline_mode = #tpu.pipeline_mode<synchronous>, transform_indices = @transform_9, window_bounds = array<i64: 1, 32>}, {pipeline_mode = #tpu.pipeline_mode<synchronous>, transform_indices = @transform_10, window_bounds = array<i64: 32, 32>}, {pipeline_mode = #tpu.pipeline_mode<synchronous>, transform_indices = @transform_11, window_bounds = array<i64: 1, 32>}, {pipeline_mode = #tpu.pipeline_mode<synchronous>, transform_indices = @transform_12, window_bounds = array<i64: 32, 32>}, {pipeline_mode = #tpu.pipeline_mode<synchronous>, transform_indices = @transform_13, window_bounds = array<i64: 1, 32>}, {transform_indices = @transform_14, window_bounds = array<i64: 1, 8, 32>}]} {
    %c0 = arith.constant 0 : index
    %c0_0 = arith.constant 0 : index
    %c0_1 = arith.constant 0 : index
    %0 = vector.load %arg1[%c0, %c0_0, %c0_1] : memref<1x8x32xf32, #tpu.memory_space<vmem>>, vector<1x8x32xf32>
    %1 = vector.shape_cast %0 : vector<1x8x32xf32> to vector<8x32xf32>
    %c0_2 = arith.constant 0 : index
    %c0_3 = arith.constant 0 : index
    %c0_4 = arith.constant 0 : index
    %2 = vector.load %arg2[%c0_2, %c0_3, %c0_4] : memref<1x16x32xf32, #tpu.memory_space<vmem>>, vector<1x16x32xf32>
    %3 = vector.shape_cast %2 : vector<1x16x32xf32> to vector<16x32xf32>
    %c0_5 = arith.constant 0 : index
    %c0_6 = arith.constant 0 : index
    %4 = vector.load %arg3[%c0_5, %c0_6] : memref<1x32xf32, #tpu.memory_space<vmem>>, vector<1x32xf32>
    %c0_7 = arith.constant 0 : index
    %c0_8 = arith.constant 0 : index
    %5 = vector.load %arg4[%c0_7, %c0_8] : memref<1x32xf32, #tpu.memory_space<vmem>>, vector<1x32xf32>
    %cst = arith.constant dense<0.000000e+00> : vector<8xf32>
    %6 = vector.multi_reduction <add>, %1, %cst [1] : vector<8x32xf32> to vector<8xf32>
    %7 = vector.shape_cast %6 : vector<8xf32> to vector<8x1xf32>
    %cst_9 = arith.constant 3.200000e+01 : f32
    %8 = vector.broadcast %cst_9 : f32 to vector<8x1xf32>
    %9 = arith.divf %7, %8 : vector<8x1xf32>
    %10 = vector.broadcast %9 : vector<8x1xf32> to vector<8x32xf32>
    %11 = arith.subf %1, %10 : vector<8x32xf32>
    %12 = arith.mulf %11, %11 : vector<8x32xf32>
    %cst_10 = arith.constant dense<0.000000e+00> : vector<8xf32>
    %13 = vector.multi_reduction <add>, %12, %cst_10 [1] : vector<8x32xf32> to vector<8xf32>
    %14 = vector.shape_cast %13 : vector<8xf32> to vector<8x1xf32>
    %cst_11 = arith.constant 3.200000e+01 : f32
    %15 = vector.broadcast %cst_11 : f32 to vector<8x1xf32>
    %16 = arith.divf %14, %15 : vector<8x1xf32>
    %17 = vector.broadcast %9 : vector<8x1xf32> to vector<8x32xf32>
    %18 = arith.subf %1, %17 : vector<8x32xf32>
    %cst_12 = arith.constant 9.99999974E-6 : f32
    %19 = vector.broadcast %cst_12 : f32 to vector<8x1xf32>
    %20 = arith.addf %16, %19 : vector<8x1xf32>
    %21 = math.rsqrt %20 : vector<8x1xf32>
    %22 = vector.broadcast %21 : vector<8x1xf32> to vector<8x32xf32>
    %23 = arith.mulf %18, %22 : vector<8x32xf32>
    %24 = vector.broadcast %4 : vector<1x32xf32> to vector<8x32xf32>
    %25 = arith.mulf %23, %24 : vector<8x32xf32>
    %26 = vector.broadcast %5 : vector<1x32xf32> to vector<8x32xf32>
    %27 = arith.addf %25, %26 : vector<8x32xf32>
    %c0_13 = arith.constant 0 : index
    %c0_14 = arith.constant 0 : index
    %28 = vector.load %arg5[%c0_13, %c0_14] : memref<1x32xf32, #tpu.memory_space<vmem>>, vector<1x32xf32>
    %c0_15 = arith.constant 0 : index
    %c0_16 = arith.constant 0 : index
    %29 = vector.load %arg6[%c0_15, %c0_16] : memref<1x32xf32, #tpu.memory_space<vmem>>, vector<1x32xf32>
    %cst_17 = arith.constant dense<0.000000e+00> : vector<16xf32>
    %30 = vector.multi_reduction <add>, %3, %cst_17 [1] : vector<16x32xf32> to vector<16xf32>
    %31 = vector.shape_cast %30 : vector<16xf32> to vector<16x1xf32>
    %cst_18 = arith.constant 3.200000e+01 : f32
    %32 = vector.broadcast %cst_18 : f32 to vector<16x1xf32>
    %33 = arith.divf %31, %32 : vector<16x1xf32>
    %34 = vector.broadcast %33 : vector<16x1xf32> to vector<16x32xf32>
    %35 = arith.subf %3, %34 : vector<16x32xf32>
    %36 = arith.mulf %35, %35 : vector<16x32xf32>
    %cst_19 = arith.constant dense<0.000000e+00> : vector<16xf32>
    %37 = vector.multi_reduction <add>, %36, %cst_19 [1] : vector<16x32xf32> to vector<16xf32>
    %38 = vector.shape_cast %37 : vector<16xf32> to vector<16x1xf32>
    %cst_20 = arith.constant 3.200000e+01 : f32
    %39 = vector.broadcast %cst_20 : f32 to vector<16x1xf32>
    %40 = arith.divf %38, %39 : vector<16x1xf32>
    %41 = vector.broadcast %33 : vector<16x1xf32> to vector<16x32xf32>
    %42 = arith.subf %3, %41 : vector<16x32xf32>
    %cst_21 = arith.constant 9.99999974E-6 : f32
    %43 = vector.broadcast %cst_21 : f32 to vector<16x1xf32>
    %44 = arith.addf %40, %43 : vector<16x1xf32>
    %45 = math.rsqrt %44 : vector<16x1xf32>
    %46 = vector.broadcast %45 : vector<16x1xf32> to vector<16x32xf32>
    %47 = arith.mulf %42, %46 : vector<16x32xf32>
    %48 = vector.broadcast %28 : vector<1x32xf32> to vector<16x32xf32>
    %49 = arith.mulf %47, %48 : vector<16x32xf32>
    %50 = vector.broadcast %29 : vector<1x32xf32> to vector<16x32xf32>
    %51 = arith.addf %49, %50 : vector<16x32xf32>
    %c0_22 = arith.constant 0 : index
    %c0_23 = arith.constant 0 : index
    %52 = vector.load %arg7[%c0_22, %c0_23] : memref<32x32xf32, #tpu.memory_space<vmem>>, vector<32x32xf32>
    %cst_24 = arith.constant dense<0.000000e+00> : vector<8x32xf32>
    %53 = tpu.matmul %27, %52, %cst_24 {dimension_numbers = #tpu.dot_dimension_numbers<[1], [0], [0], [1], [0, 0, 1, 1], [], []>} : vector<8x32xf32>, vector<32x32xf32>, vector<8x32xf32> -> vector<8x32xf32>
    %c0_25 = arith.constant 0 : index
    %c0_26 = arith.constant 0 : index
    %54 = vector.load %arg8[%c0_25, %c0_26] : memref<1x32xf32, #tpu.memory_space<vmem>>, vector<1x32xf32>
    %55 = vector.broadcast %54 : vector<1x32xf32> to vector<8x32xf32>
    %56 = arith.addf %53, %55 : vector<8x32xf32>
    %c0_27 = arith.constant 0 : index
    %c0_28 = arith.constant 0 : index
    %57 = vector.load %arg9[%c0_27, %c0_28] : memref<32x32xf32, #tpu.memory_space<vmem>>, vector<32x32xf32>
    %cst_29 = arith.constant dense<0.000000e+00> : vector<16x32xf32>
    %58 = tpu.matmul %51, %57, %cst_29 {dimension_numbers = #tpu.dot_dimension_numbers<[1], [0], [0], [1], [0, 0, 1, 1], [], []>} : vector<16x32xf32>, vector<32x32xf32>, vector<16x32xf32> -> vector<16x32xf32>
    %c0_30 = arith.constant 0 : index
    %c0_31 = arith.constant 0 : index
    %59 = vector.load %arg10[%c0_30, %c0_31] : memref<1x32xf32, #tpu.memory_space<vmem>>, vector<1x32xf32>
    %60 = vector.broadcast %59 : vector<1x32xf32> to vector<16x32xf32>
    %61 = arith.addf %58, %60 : vector<16x32xf32>
    %c0_32 = arith.constant 0 : index
    %c0_33 = arith.constant 0 : index
    %62 = vector.load %arg11[%c0_32, %c0_33] : memref<32x32xf32, #tpu.memory_space<vmem>>, vector<32x32xf32>
    %cst_34 = arith.constant dense<0.000000e+00> : vector<16x32xf32>
    %63 = tpu.matmul %51, %62, %cst_34 {dimension_numbers = #tpu.dot_dimension_numbers<[1], [0], [0], [1], [0, 0, 1, 1], [], []>} : vector<16x32xf32>, vector<32x32xf32>, vector<16x32xf32> -> vector<16x32xf32>
    %c0_35 = arith.constant 0 : index
    %c0_36 = arith.constant 0 : index
    %64 = vector.load %arg12[%c0_35, %c0_36] : memref<1x32xf32, #tpu.memory_space<vmem>>, vector<1x32xf32>
    %65 = vector.broadcast %64 : vector<1x32xf32> to vector<16x32xf32>
    %66 = arith.addf %63, %65 : vector<16x32xf32>
    %cst_37 = arith.constant 0.353553385 : f32
    %67 = vector.broadcast %cst_37 : f32 to vector<8x32xf32>
    %68 = arith.mulf %56, %67 : vector<8x32xf32>
    %69 = vector.shape_cast %68 : vector<8x32xf32> to vector<1x8x32xf32>
    %70 = vector.shape_cast %61 : vector<16x32xf32> to vector<1x16x32xf32>
    %71 = vector.shape_cast %66 : vector<16x32xf32> to vector<1x16x32xf32>
    %c0_38 = arith.constant 0 : index
    %c0_39 = arith.constant 0 : index
    %72 = vector.load %arg13[%c0_38, %c0_39] : memref<32x32xf32, #tpu.memory_space<vmem>>, vector<32x32xf32>
    %c0_40 = arith.constant 0 : index
    %c0_41 = arith.constant 0 : index
    %73 = vector.load %arg14[%c0_40, %c0_41] : memref<1x32xf32, #tpu.memory_space<vmem>>, vector<1x32xf32>
    %74 = vector.shape_cast %73 : vector<1x32xf32> to vector<1x1x32xf32>
    %75 = vector.broadcast %74 : vector<1x1x32xf32> to vector<1x8x32xf32>
    %76 = vector.extract_strided_slice %69 {offsets = [0, 0, 0], sizes = [1, 8, 8], strides = [1, 1, 1]} : vector<1x8x32xf32> to vector<1x8x8xf32>
    %77 = vector.extract_strided_slice %70 {offsets = [0, 0, 0], sizes = [1, 16, 8], strides = [1, 1, 1]} : vector<1x16x32xf32> to vector<1x16x8xf32>
    %78 = vector.extract_strided_slice %71 {offsets = [0, 0, 0], sizes = [1, 16, 8], strides = [1, 1, 1]} : vector<1x16x32xf32> to vector<1x16x8xf32>
    %cst_42 = arith.constant dense<0.000000e+00> : vector<1x8x16xf32>
    %79 = tpu.matmul %76, %77, %cst_42 {dimension_numbers = #tpu.dot_dimension_numbers<[2], [2], [1], [1], [0, 0, 0, 1, 1, 1], [0], [0]>} : vector<1x8x8xf32>, vector<1x16x8xf32>, vector<1x8x16xf32> -> vector<1x8x16xf32>
    %cst_43 = arith.constant dense<0xFF800000> : vector<1x8xf32>
    %80 = vector.multi_reduction <maximumf>, %79, %cst_43 [2] : vector<1x8x16xf32> to vector<1x8xf32>
    %81 = vector.shape_cast %80 : vector<1x8xf32> to vector<1x8x1xf32>
    %82 = vector.broadcast %81 : vector<1x8x1xf32> to vector<1x8x16xf32>
    %83 = arith.subf %79, %82 : vector<1x8x16xf32>
    %84 = math.exp %83 : vector<1x8x16xf32>
    %cst_44 = arith.constant dense<0.000000e+00> : vector<1x8xf32>
    %85 = vector.multi_reduction <add>, %84, %cst_44 [2] : vector<1x8x16xf32> to vector<1x8xf32>
    %86 = vector.shape_cast %85 : vector<1x8xf32> to vector<1x8x1xf32>
    %87 = tpu.reciprocal %86 {approx = true} : vector<1x8x1xf32> -> vector<1x8x1xf32>
    %88 = vector.broadcast %87 : vector<1x8x1xf32> to vector<1x8x16xf32>
    %89 = arith.mulf %84, %88 : vector<1x8x16xf32>
    %cst_45 = arith.constant dense<0.000000e+00> : vector<1x8x8xf32>
    %90 = tpu.matmul %89, %78, %cst_45 {dimension_numbers = #tpu.dot_dimension_numbers<[2], [1], [1], [2], [0, 0, 0, 1, 1, 2], [0], [0]>} : vector<1x8x16xf32>, vector<1x16x8xf32>, vector<1x8x8xf32> -> vector<1x8x8xf32>
    %91 = vector.extract_strided_slice %72 {offsets = [0, 0], sizes = [8, 32], strides = [1, 1]} : vector<32x32xf32> to vector<8x32xf32>
    %cst_46 = arith.constant dense<0.000000e+00> : vector<1x8x32xf32>
    %92 = tpu.matmul %90, %91, %cst_46 {dimension_numbers = #tpu.dot_dimension_numbers<[2], [0], [0, 1], [1], [0, 0, 0, 1, 1, 1], [], []>} : vector<1x8x8xf32>, vector<8x32xf32>, vector<1x8x32xf32> -> vector<1x8x32xf32>
    %93 = arith.addf %75, %92 : vector<1x8x32xf32>
    %94 = vector.extract_strided_slice %69 {offsets = [0, 0, 8], sizes = [1, 8, 8], strides = [1, 1, 1]} : vector<1x8x32xf32> to vector<1x8x8xf32>
    %95 = vector.extract_strided_slice %70 {offsets = [0, 0, 8], sizes = [1, 16, 8], strides = [1, 1, 1]} : vector<1x16x32xf32> to vector<1x16x8xf32>
    %96 = vector.extract_strided_slice %71 {offsets = [0, 0, 8], sizes = [1, 16, 8], strides = [1, 1, 1]} : vector<1x16x32xf32> to vector<1x16x8xf32>
    %cst_47 = arith.constant dense<0.000000e+00> : vector<1x8x16xf32>
    %97 = tpu.matmul %94, %95, %cst_47 {dimension_numbers = #tpu.dot_dimension_numbers<[2], [2], [1], [1], [0, 0, 0, 1, 1, 1], [0], [0]>} : vector<1x8x8xf32>, vector<1x16x8xf32>, vector<1x8x16xf32> -> vector<1x8x16xf32>
    %cst_48 = arith.constant dense<0xFF800000> : vector<1x8xf32>
    %98 = vector.multi_reduction <maximumf>, %97, %cst_48 [2] : vector<1x8x16xf32> to vector<1x8xf32>
    %99 = vector.shape_cast %98 : vector<1x8xf32> to vector<1x8x1xf32>
    %100 = vector.broadcast %99 : vector<1x8x1xf32> to vector<1x8x16xf32>
    %101 = arith.subf %97, %100 : vector<1x8x16xf32>
    %102 = math.exp %101 : vector<1x8x16xf32>
    %cst_49 = arith.constant dense<0.000000e+00> : vector<1x8xf32>
    %103 = vector.multi_reduction <add>, %102, %cst_49 [2] : vector<1x8x16xf32> to vector<1x8xf32>
    %104 = vector.shape_cast %103 : vector<1x8xf32> to vector<1x8x1xf32>
    %105 = tpu.reciprocal %104 {approx = true} : vector<1x8x1xf32> -> vector<1x8x1xf32>
    %106 = vector.broadcast %105 : vector<1x8x1xf32> to vector<1x8x16xf32>
    %107 = arith.mulf %102, %106 : vector<1x8x16xf32>
    %cst_50 = arith.constant dense<0.000000e+00> : vector<1x8x8xf32>
    %108 = tpu.matmul %107, %96, %cst_50 {dimension_numbers = #tpu.dot_dimension_numbers<[2], [1], [1], [2], [0, 0, 0, 1, 1, 2], [0], [0]>} : vector<1x8x16xf32>, vector<1x16x8xf32>, vector<1x8x8xf32> -> vector<1x8x8xf32>
    %109 = vector.extract_strided_slice %72 {offsets = [8, 0], sizes = [8, 32], strides = [1, 1]} : vector<32x32xf32> to vector<8x32xf32>
    %cst_51 = arith.constant dense<0.000000e+00> : vector<1x8x32xf32>
    %110 = tpu.matmul %108, %109, %cst_51 {dimension_numbers = #tpu.dot_dimension_numbers<[2], [0], [0, 1], [1], [0, 0, 0, 1, 1, 1], [], []>} : vector<1x8x8xf32>, vector<8x32xf32>, vector<1x8x32xf32> -> vector<1x8x32xf32>
    %111 = arith.addf %93, %110 : vector<1x8x32xf32>
    %112 = vector.extract_strided_slice %69 {offsets = [0, 0, 16], sizes = [1, 8, 8], strides = [1, 1, 1]} : vector<1x8x32xf32> to vector<1x8x8xf32>
    %113 = vector.extract_strided_slice %70 {offsets = [0, 0, 16], sizes = [1, 16, 8], strides = [1, 1, 1]} : vector<1x16x32xf32> to vector<1x16x8xf32>
    %114 = vector.extract_strided_slice %71 {offsets = [0, 0, 16], sizes = [1, 16, 8], strides = [1, 1, 1]} : vector<1x16x32xf32> to vector<1x16x8xf32>
    %cst_52 = arith.constant dense<0.000000e+00> : vector<1x8x16xf32>
    %115 = tpu.matmul %112, %113, %cst_52 {dimension_numbers = #tpu.dot_dimension_numbers<[2], [2], [1], [1], [0, 0, 0, 1, 1, 1], [0], [0]>} : vector<1x8x8xf32>, vector<1x16x8xf32>, vector<1x8x16xf32> -> vector<1x8x16xf32>
    %cst_53 = arith.constant dense<0xFF800000> : vector<1x8xf32>
    %116 = vector.multi_reduction <maximumf>, %115, %cst_53 [2] : vector<1x8x16xf32> to vector<1x8xf32>
    %117 = vector.shape_cast %116 : vector<1x8xf32> to vector<1x8x1xf32>
    %118 = vector.broadcast %117 : vector<1x8x1xf32> to vector<1x8x16xf32>
    %119 = arith.subf %115, %118 : vector<1x8x16xf32>
    %120 = math.exp %119 : vector<1x8x16xf32>
    %cst_54 = arith.constant dense<0.000000e+00> : vector<1x8xf32>
    %121 = vector.multi_reduction <add>, %120, %cst_54 [2] : vector<1x8x16xf32> to vector<1x8xf32>
    %122 = vector.shape_cast %121 : vector<1x8xf32> to vector<1x8x1xf32>
    %123 = tpu.reciprocal %122 {approx = true} : vector<1x8x1xf32> -> vector<1x8x1xf32>
    %124 = vector.broadcast %123 : vector<1x8x1xf32> to vector<1x8x16xf32>
    %125 = arith.mulf %120, %124 : vector<1x8x16xf32>
    %cst_55 = arith.constant dense<0.000000e+00> : vector<1x8x8xf32>
    %126 = tpu.matmul %125, %114, %cst_55 {dimension_numbers = #tpu.dot_dimension_numbers<[2], [1], [1], [2], [0, 0, 0, 1, 1, 2], [0], [0]>} : vector<1x8x16xf32>, vector<1x16x8xf32>, vector<1x8x8xf32> -> vector<1x8x8xf32>
    %127 = vector.extract_strided_slice %72 {offsets = [16, 0], sizes = [8, 32], strides = [1, 1]} : vector<32x32xf32> to vector<8x32xf32>
    %cst_56 = arith.constant dense<0.000000e+00> : vector<1x8x32xf32>
    %128 = tpu.matmul %126, %127, %cst_56 {dimension_numbers = #tpu.dot_dimension_numbers<[2], [0], [0, 1], [1], [0, 0, 0, 1, 1, 1], [], []>} : vector<1x8x8xf32>, vector<8x32xf32>, vector<1x8x32xf32> -> vector<1x8x32xf32>
    %129 = arith.addf %111, %128 : vector<1x8x32xf32>
    %130 = vector.extract_strided_slice %69 {offsets = [0, 0, 24], sizes = [1, 8, 8], strides = [1, 1, 1]} : vector<1x8x32xf32> to vector<1x8x8xf32>
    %131 = vector.extract_strided_slice %70 {offsets = [0, 0, 24], sizes = [1, 16, 8], strides = [1, 1, 1]} : vector<1x16x32xf32> to vector<1x16x8xf32>
    %132 = vector.extract_strided_slice %71 {offsets = [0, 0, 24], sizes = [1, 16, 8], strides = [1, 1, 1]} : vector<1x16x32xf32> to vector<1x16x8xf32>
    %cst_57 = arith.constant dense<0.000000e+00> : vector<1x8x16xf32>
    %133 = tpu.matmul %130, %131, %cst_57 {dimension_numbers = #tpu.dot_dimension_numbers<[2], [2], [1], [1], [0, 0, 0, 1, 1, 1], [0], [0]>} : vector<1x8x8xf32>, vector<1x16x8xf32>, vector<1x8x16xf32> -> vector<1x8x16xf32>
    %cst_58 = arith.constant dense<0xFF800000> : vector<1x8xf32>
    %134 = vector.multi_reduction <maximumf>, %133, %cst_58 [2] : vector<1x8x16xf32> to vector<1x8xf32>
    %135 = vector.shape_cast %134 : vector<1x8xf32> to vector<1x8x1xf32>
    %136 = vector.broadcast %135 : vector<1x8x1xf32> to vector<1x8x16xf32>
    %137 = arith.subf %133, %136 : vector<1x8x16xf32>
    %138 = math.exp %137 : vector<1x8x16xf32>
    %cst_59 = arith.constant dense<0.000000e+00> : vector<1x8xf32>
    %139 = vector.multi_reduction <add>, %138, %cst_59 [2] : vector<1x8x16xf32> to vector<1x8xf32>
    %140 = vector.shape_cast %139 : vector<1x8xf32> to vector<1x8x1xf32>
    %141 = tpu.reciprocal %140 {approx = true} : vector<1x8x1xf32> -> vector<1x8x1xf32>
    %142 = vector.broadcast %141 : vector<1x8x1xf32> to vector<1x8x16xf32>
    %143 = arith.mulf %138, %142 : vector<1x8x16xf32>
    %cst_60 = arith.constant dense<0.000000e+00> : vector<1x8x8xf32>
    %144 = tpu.matmul %143, %132, %cst_60 {dimension_numbers = #tpu.dot_dimension_numbers<[2], [1], [1], [2], [0, 0, 0, 1, 1, 2], [0], [0]>} : vector<1x8x16xf32>, vector<1x16x8xf32>, vector<1x8x8xf32> -> vector<1x8x8xf32>
    %145 = vector.extract_strided_slice %72 {offsets = [24, 0], sizes = [8, 32], strides = [1, 1]} : vector<32x32xf32> to vector<8x32xf32>
    %cst_61 = arith.constant dense<0.000000e+00> : vector<1x8x32xf32>
    %146 = tpu.matmul %144, %145, %cst_61 {dimension_numbers = #tpu.dot_dimension_numbers<[2], [0], [0, 1], [1], [0, 0, 0, 1, 1, 1], [], []>} : vector<1x8x8xf32>, vector<8x32xf32>, vector<1x8x32xf32> -> vector<1x8x32xf32>
    %147 = arith.addf %129, %146 : vector<1x8x32xf32>
    %c0_62 = arith.constant 0 : index
    %c0_63 = arith.constant 0 : index
    %c0_64 = arith.constant 0 : index
    %148 = vector.load %arg15[%c0_62, %c0_63, %c0_64] : memref<1x8x32xf32, #tpu.memory_space<vmem>>, vector<1x8x32xf32>
    tpu.vector_store %arg15[%c0_62, %c0_63, %c0_64], %147 {strides = array<i32>} : memref<1x8x32xf32, #tpu.memory_space<vmem>>, vector<1x8x32xf32>,
    return
  }
  func.func @transform_0(%arg0: i32) -> (i32, i32, i32) {
    %c0_i32 = arith.constant 0 : i32
    %c0_i32_0 = arith.constant 0 : i32
    %c0_i32_1 = arith.constant 0 : i32
    return %arg0, %c0_i32, %c0_i32_0 : i32, i32, i32
  }
  func.func @transform_1(%arg0: i32) -> (i32, i32, i32) {
    %c0_i32 = arith.constant 0 : i32
    %c0_i32_0 = arith.constant 0 : i32
    %c0_i32_1 = arith.constant 0 : i32
    return %arg0, %c0_i32, %c0_i32_0 : i32, i32, i32
  }
  func.func @transform_2(%arg0: i32) -> (i32, i32) {
    %c0_i32 = arith.constant 0 : i32
    %c0_i32_0 = arith.constant 0 : i32
    %c0_i32_1 = arith.constant 0 : i32
    return %c0_i32, %c0_i32_0 : i32, i32
  }
  func.func @transform_3(%arg0: i32) -> (i32, i32) {
    %c0_i32 = arith.constant 0 : i32
    %c0_i32_0 = arith.constant 0 : i32
    %c0_i32_1 = arith.constant 0 : i32
    return %c0_i32, %c0_i32_0 : i32, i32
  }
  func.func @transform_4(%arg0: i32) -> (i32, i32) {
    %c0_i32 = arith.constant 0 : i32
    %c0_i32_0 = arith.constant 0 : i32
    %c0_i32_1 = arith.constant 0 : i32
    return %c0_i32, %c0_i32_0 : i32, i32
  }
  func.func @transform_5(%arg0: i32) -> (i32, i32) {
    %c0_i32 = arith.constant 0 : i32
    %c0_i32_0 = arith.constant 0 : i32
    %c0_i32_1 = arith.constant 0 : i32
    return %c0_i32, %c0_i32_0 : i32, i32
  }
  func.func @transform_6(%arg0: i32) -> (i32, i32) {
    %c0_i32 = arith.constant 0 : i32
    %c0_i32_0 = arith.constant 0 : i32
    %c0_i32_1 = arith.constant 0 : i32
    return %c0_i32, %c0_i32_0 : i32, i32
  }
  func.func @transform_7(%arg0: i32) -> (i32, i32) {
    %c0_i32 = arith.constant 0 : i32
    %c0_i32_0 = arith.constant 0 : i32
    %c0_i32_1 = arith.constant 0 : i32
    return %c0_i32, %c0_i32_0 : i32, i32
  }
  func.func @transform_8(%arg0: i32) -> (i32, i32) {
    %c0_i32 = arith.constant 0 : i32
    %c0_i32_0 = arith.constant 0 : i32
    %c0_i32_1 = arith.constant 0 : i32
    return %c0_i32, %c0_i32_0 : i32, i32
  }
  func.func @transform_9(%arg0: i32) -> (i32, i32) {
    %c0_i32 = arith.constant 0 : i32
    %c0_i32_0 = arith.constant 0 : i32
    %c0_i32_1 = arith.constant 0 : i32
    return %c0_i32, %c0_i32_0 : i32, i32
  }
  func.func @transform_10(%arg0: i32) -> (i32, i32) {
    %c0_i32 = arith.constant 0 : i32
    %c0_i32_0 = arith.constant 0 : i32
    %c0_i32_1 = arith.constant 0 : i32
    return %c0_i32, %c0_i32_0 : i32, i32
  }
  func.func @transform_11(%arg0: i32) -> (i32, i32) {
    %c0_i32 = arith.constant 0 : i32
    %c0_i32_0 = arith.constant 0 : i32
    %c0_i32_1 = arith.constant 0 : i32
    return %c0_i32, %c0_i32_0 : i32, i32
  }
  func.func @transform_12(%arg0: i32) -> (i32, i32) {
    %c0_i32 = arith.constant 0 : i32
    %c0_i32_0 = arith.constant 0 : i32
    %c0_i32_1 = arith.constant 0 : i32
    return %c0_i32, %c0_i32_0 : i32, i32
  }
  func.func @transform_13(%arg0: i32) -> (i32, i32) {
    %c0_i32 = arith.constant 0 : i32
    %c0_i32_0 = arith.constant 0 : i32
    %c0_i32_1 = arith.constant 0 : i32
    return %c0_i32, %c0_i32_0 : i32, i32
  }
  func.func @transform_14(%arg0: i32) -> (i32, i32, i32) {
    %c0_i32 = arith.constant 0 : i32
    %c0_i32_0 = arith.constant 0 : i32
    %c0_i32_1 = arith.constant 0 : i32
    return %arg0, %c0_i32, %c0_i32_0 : i32, i32, i32
  }
}

</mosaic_0001>

<llo_original>
// kernel: tpu_custom_call.1
$region0: #{tpu_custom_call.1}
  #allocation0 [shape = 'u32[]', space=smem, size = 0x4, offset = 0x4, fixed_abs, tag = 'smem constant byte address 0x4 - core index']
  #allocation1 [shape = 'u32[72,128]{1,0:T(1,128)}', space=vmem, size = 0x9000, scoped, tag = 'internal scratch']
  %s0 = inlined_call_operand.hbm [shape: f32[2,8,32], index: 0, kind: input, shape index: {}]
  %s1 = inlined_call_operand.hbm [shape: f32[2,16,32], index: 1, kind: input, shape index: {}]
  %s2 = inlined_call_operand.vmem [shape: f32[1,32], index: 2, kind: input, shape index: {}]
  %s3 = inlined_call_operand.vmem [shape: f32[1,32], index: 3, kind: input, shape index: {}]
  %s4 = inlined_call_operand.vmem [shape: f32[1,32], index: 4, kind: input, shape index: {}]
  %s5 = inlined_call_operand.vmem [shape: f32[1,32], index: 5, kind: input, shape index: {}]
  %s6 = inlined_call_operand.hbm [shape: f32[32,32], index: 6, kind: input, shape index: {}]
  %s7 = inlined_call_operand.vmem [shape: f32[1,32], index: 7, kind: input, shape index: {}]
  %s8 = inlined_call_operand.hbm [shape: f32[32,32], index: 8, kind: input, shape index: {}]
  %s9 = inlined_call_operand.vmem [shape: f32[1,32], index: 9, kind: input, shape index: {}]
  %s10 = inlined_call_operand.hbm [shape: f32[32,32], index: 10, kind: input, shape index: {}]
  %s11 = inlined_call_operand.vmem [shape: f32[1,32], index: 11, kind: input, shape index: {}]
  %s12 = inlined_call_operand.hbm [shape: f32[32,32], index: 12, kind: input, shape index: {}]
  %s13 = inlined_call_operand.vmem [shape: f32[1,32], index: 13, kind: input, shape index: {}]
  %s14 = inlined_call_operand.hbm [shape: f32[2,8,32], index: 14, kind: output, shape index: {}]
  %s15 = sld [smem:[#allocation0]]
  $region113: #{tpu_custom_call.1} parent=0
    _
  %s17 = ssub.s32 1, %s15
  %s18 = scalar_select 0, %s17, %s15
  $region1: #{tpu_custom_call.1} parent=0
    #allocation2 [shape = 'u8[8192]{0}', space=vmem, size = 0x2000, scoped, tag = 'input window, operand 0']
    #allocation3 [shape = 's32[2]{0}', space=sflag, size = 0x8, scoped, tag = 'scoped memory for tpu_custom_call.1']
    #allocation4 [shape = 's32[2]{0}', space=sflag, size = 0x8, scoped, tag = 'scoped memory for tpu_custom_call.1']
    #allocation5 [shape = 'u8[16384]{0}', space=vmem, size = 0x4000, scoped, tag = 'input window, operand 1']
    #allocation6 [shape = 's32[2]{0}', space=sflag, size = 0x8, scoped, tag = 'scoped memory for tpu_custom_call.1']
    #allocation7 [shape = 'u8[16384]{0}', space=vmem, size = 0x4000, scoped, tag = 'input window, operand 6, single buffered']
    #allocation8 [shape = 'u8[16384]{0}', space=vmem, size = 0x4000, scoped, tag = 'input window, operand 8, single buffered']
    #allocation9 [shape = 's32[1]{0}', space=sflag, size = 0x4, scoped, tag = 'scoped memory for tpu_custom_call.1']
    #allocation10 [shape = 'u8[16384]{0}', space=vmem, size = 0x4000, scoped, tag = 'input window, operand 10, single buffered']
    #allocation11 [shape = 'u8[16384]{0}', space=vmem, size = 0x4000, scoped, tag = 'input window, operand 12, single buffered']
    #allocation12 [shape = 's32[1]{0}', space=sflag, size = 0x4, scoped, tag = 'scoped memory for tpu_custom_call.1']
    #allocation13 [shape = 'u8[8192]{0}', space=vmem, size = 0x2000, scoped, tag = 'output window, operand 0']
    %19 = vsyncpa [#allocation3], 0
    %s20 = scalar_lea.sflag [#allocation3], 1
    %21 = vsyncpa %s20, 0
    %22 = vsyncpa [#allocation6], 0
    %s23 = scalar_lea.sflag [#allocation6], 1
    %24 = vsyncpa %s23, 0
    %25 = vsyncpa [#allocation9], 0
    %26 = vsyncpa [#allocation12], 0
    %27 = vsyncpa [#allocation4], 0
    %s28 = scalar_lea.sflag [#allocation4], 1
    %29 = vsyncpa %s28, 0
    loop: start=0, step=1, limit=4
    $region2: #{tpu_custom_call.1} parent=1 // loop_pre_header
      _
    $region3: #{tpu_custom_call.1} parent=1 // loop_header
      %s31 = sphi 0, %s35
      %p32 = scmp.ge.s32.totalorder %s31, 4
      %s41 = sphi 0, %s43
      %s44 = sphi 0, %s41
      %s45 = sphi 0, %s44
      %s61 = sphi 0, %s45
      %s67 = sphi 0, %s69
      %s70 = sphi 0, %s67
      %s71 = sphi 0, %s70
      %s87 = sphi 0, %s71
      %s91 = sphi 0, %s91
      %s93 = sphi 0, %s91
      %s94 = sphi 0, %s93
      %s108 = sphi 0, %s94
      %s112 = sphi 0, %s112
      %s114 = sphi 0, %s112
      %s115 = sphi 0, %s114
      %s129 = sphi 0, %s115
      %s133 = sphi 0, %s133
      %s135 = sphi 0, %s133
      %s136 = sphi 0, %s135
      %s150 = sphi 0, %s136
      %s154 = sphi 0, %s154
      %s156 = sphi 0, %s154
      %s157 = sphi 0, %s156
      %s171 = sphi 0, %s157
      %s175 = sphi 0, %s175
      %s177 = sphi 0, %s175
      %s178 = sphi 0, %s177
      %s192 = sphi 0, %s178
      %s196 = sphi 0, %s196
      %s198 = sphi 0, %s196
      %s199 = sphi 0, %s198
      %s213 = sphi 0, %s199
      %s217 = sphi 0, %s217
      %s219 = sphi 0, %s217
      %s220 = sphi 0, %s219
      %s234 = sphi 0, %s220
      %s238 = sphi 0, %s238
      %s240 = sphi 0, %s238
      %s241 = sphi 0, %s240
      %s255 = sphi 0, %s241
      %s259 = sphi 0, %s259
      %s261 = sphi 0, %s259
      %s262 = sphi 0, %s261
      %s276 = sphi 0, %s262
      %s280 = sphi 0, %s280
      %s282 = sphi 0, %s280
      %s283 = sphi 0, %s282
      %s297 = sphi 0, %s283
      %s301 = sphi 0, %s301
      %s303 = sphi 0, %s301
      %s304 = sphi 0, %s303
      %s318 = sphi 0, %s304
      %s322 = sphi 0, %s322
      %s324 = sphi 0, %s322
      %s325 = sphi 0, %s324
      %s339 = sphi 0, %s325
      %s345 = sphi 0, %s347
      %s348 = sphi 0, %s345
      %s349 = sphi 0, %s348
      %s365 = sphi 0, %s349
    $region4: #{tpu_custom_call.1} parent=1 // loop_header_branch
      %34 = sbr.rel (%p32) target = $region8
    $region5: #{tpu_custom_call.1} parent=1 // loop_body
      %s36 = ssub.s32 %s31, 1
      %s37 = ssub.s32 %s31, 2
      %s38 = sadd.s32 %s31, 1
      %s39 = ssub.s32 %s31, %s38
      %p40 = scmp.eq.s32.totalorder %s39, 0
      %s42 = sadd.s32 %s41, 1
      %s43 = scalar_select %p40, %s41, %s42
      %p46 = pneg %p40
      %p47 = scmp.eq.s32.totalorder %s31, 1
      %p48 = por %p46, %p47
      %p49 = scmp.ne.s32.totalorder %s41, %s44
      %p50 = scmp.eq.s32.totalorder %s31, 0
      %p51 = por %p49, %p50
      %p52 = scmp.ne.s32.totalorder %s41, %s44
      %p53 = scmp.eq.s32.totalorder %s36, 1
      %p54 = por %p52, %p53
      %p55 = scmp.ne.s32.totalorder %s44, %s45
      %p56 = scmp.eq.s32.totalorder %s36, 0
      %p57 = por %p55, %p56
      %p58 = scmp.ne.s32.totalorder %s44, %s45
      %p59 = scmp.eq.s32.totalorder %s37, 1
      %p60 = por %p58, %p59
      %p62 = scmp.ne.s32.totalorder %s45, %s61
      %p63 = scmp.eq.s32.totalorder %s37, 0
      %p64 = por %p62, %p63
      %s65 = ssub.s32 %s31, %s38
      %p66 = scmp.eq.s32.totalorder %s65, 0
      %s68 = sadd.s32 %s67, 1
      %s69 = scalar_select %p66, %s67, %s68
      %p72 = pneg %p66
      %p73 = scmp.eq.s32.totalorder %s31, 1
      %p74 = por %p72, %p73
      %p75 = scmp.ne.s32.totalorder %s67, %s70
      %p76 = scmp.eq.s32.totalorder %s31, 0
      %p77 = por %p75, %p76
      %p78 = scmp.ne.s32.totalorder %s67, %s70
      %p79 = scmp.eq.s32.totalorder %s36, 1
      %p80 = por %p78, %p79
      %p81 = scmp.ne.s32.totalorder %s70, %s71
      %p82 = scmp.eq.s32.totalorder %s36, 0
      %p83 = por %p81, %p82
      %p84 = scmp.ne.s32.totalorder %s70, %s71
      %p85 = scmp.eq.s32.totalorder %s37, 1
      %p86 = por %p84, %p85
      %p88 = scmp.ne.s32.totalorder %s71, %s87
      %p89 = scmp.eq.s32.totalorder %s37, 0
      %p90 = por %p88, %p89
      %s92 = sadd.s32 %s91, 1
      %p95 = scmp.eq.s32.totalorder %s31, 1
      %p96 = scmp.ne.s32.totalorder %s91, %s93
      %p97 = scmp.eq.s32.totalorder %s31, 0
      %p98 = por %p96, %p97
      %p99 = scmp.ne.s32.totalorder %s91, %s93
      %p100 = scmp.eq.s32.totalorder %s36, 1
      %p101 = por %p99, %p100
      %p102 = scmp.ne.s32.totalorder %s93, %s94
      %p103 = scmp.eq.s32.totalorder %s36, 0
      %p104 = por %p102, %p103
      %p105 = scmp.ne.s32.totalorder %s93, %s94
      %p106 = scmp.eq.s32.totalorder %s37, 1
      %p107 = por %p105, %p106
      %p109 = scmp.ne.s32.totalorder %s94, %s108
      %p110 = scmp.eq.s32.totalorder %s37, 0
      %p111 = por %p109, %p110
      %s113 = sadd.s32 %s112, 1
      %p116 = scmp.eq.s32.totalorder %s31, 1
      %p117 = scmp.ne.s32.totalorder %s112, %s114
      %p118 = scmp.eq.s32.totalorder %s31, 0
      %p119 = por %p117, %p118
      %p120 = scmp.ne.s32.totalorder %s112, %s114
      %p121 = scmp.eq.s32.totalorder %s36, 1
      %p122 = por %p120, %p121
      %p123 = scmp.ne.s32.totalorder %s114, %s115
      %p124 = scmp.eq.s32.totalorder %s36, 0
      %p125 = por %p123, %p124
      %p126 = scmp.ne.s32.totalorder %s114, %s115
      %p127 = scmp.eq.s32.totalorder %s37, 1
      %p128 = por %p126, %p127
      %p130 = scmp.ne.s32.totalorder %s115, %s129
      %p131 = scmp.eq.s32.totalorder %s37, 0
      %p132 = por %p130, %p131
      %s134 = sadd.s32 %s133, 1
      %p137 = scmp.eq.s32.totalorder %s31, 1
      %p138 = scmp.ne.s32.totalorder %s133, %s135
      %p139 = scmp.eq.s32.totalorder %s31, 0
      %p140 = por %p138, %p139
      %p141 = scmp.ne.s32.totalorder %s133, %s135
      %p142 = scmp.eq.s32.totalorder %s36, 1
      %p143 = por %p141, %p142
      %p144 = scmp.ne.s32.totalorder %s135, %s136
      %p145 = scmp.eq.s32.totalorder %s36, 0
      %p146 = por %p144, %p145
      %p147 = scmp.ne.s32.totalorder %s135, %s136
      %p148 = scmp.eq.s32.totalorder %s37, 1
      %p149 = por %p147, %p148
      %p151 = scmp.ne.s32.totalorder %s136, %s150
      %p152 = scmp.eq.s32.totalorder %s37, 0
      %p153 = por %p151, %p152
      %s155 = sadd.s32 %s154, 1
      %p158 = scmp.eq.s32.totalorder %s31, 1
      %p159 = scmp.ne.s32.totalorder %s154, %s156
      %p160 = scmp.eq.s32.totalorder %s31, 0
      %p161 = por %p159, %p160
      %p162 = scmp.ne.s32.totalorder %s154, %s156
      %p163 = scmp.eq.s32.totalorder %s36, 1
      %p164 = por %p162, %p163
      %p165 = scmp.ne.s32.totalorder %s156, %s157
      %p166 = scmp.eq.s32.totalorder %s36, 0
      %p167 = por %p165, %p166
      %p168 = scmp.ne.s32.totalorder %s156, %s157
      %p169 = scmp.eq.s32.totalorder %s37, 1
      %p170 = por %p168, %p169
      %p172 = scmp.ne.s32.totalorder %s157, %s171
      %p173 = scmp.eq.s32.totalorder %s37, 0
      %p174 = por %p172, %p173
      %s176 = sadd.s32 %s175, 1
      %p179 = scmp.eq.s32.totalorder %s31, 1
      %p180 = scmp.ne.s32.totalorder %s175, %s177
      %p181 = scmp.eq.s32.totalorder %s31, 0
      %p182 = por %p180, %p181
      %p183 = scmp.ne.s32.totalorder %s175, %s177
      %p184 = scmp.eq.s32.totalorder %s36, 1
      %p185 = por %p183, %p184
      %p186 = scmp.ne.s32.totalorder %s177, %s178
      %p187 = scmp.eq.s32.totalorder %s36, 0
      %p188 = por %p186, %p187
      %p189 = scmp.ne.s32.totalorder %s177, %s178
      %p190 = scmp.eq.s32.totalorder %s37, 1
      %p191 = por %p189, %p190
      %p193 = scmp.ne.s32.totalorder %s178, %s192
      %p194 = scmp.eq.s32.totalorder %s37, 0
      %p195 = por %p193, %p194
      %s197 = sadd.s32 %s196, 1
      %p200 = scmp.eq.s32.totalorder %s31, 1
      %p201 = scmp.ne.s32.totalorder %s196, %s198
      %p202 = scmp.eq.s32.totalorder %s31, 0
      %p203 = por %p201, %p202
      %p204 = scmp.ne.s32.totalorder %s196, %s198
      %p205 = scmp.eq.s32.totalorder %s36, 1
      %p206 = por %p204, %p205
      %p207 = scmp.ne.s32.totalorder %s198, %s199
      %p208 = scmp.eq.s32.totalorder %s36, 0
      %p209 = por %p207, %p208
      %p210 = scmp.ne.s32.totalorder %s198, %s199
      %p211 = scmp.eq.s32.totalorder %s37, 1
      %p212 = por %p210, %p211
      %p214 = scmp.ne.s32.totalorder %s199, %s213
      %p215 = scmp.eq.s32.totalorder %s37, 0
      %p216 = por %p214, %p215
      %s218 = sadd.s32 %s217, 1
      %p221 = scmp.eq.s32.totalorder %s31, 1
      %p222 = scmp.ne.s32.totalorder %s217, %s219
      %p223 = scmp.eq.s32.totalorder %s31, 0
      %p224 = por %p222, %p223
      %p225 = scmp.ne.s32.totalorder %s217, %s219
      %p226 = scmp.eq.s32.totalorder %s36, 1
      %p227 = por %p225, %p226
      %p228 = scmp.ne.s32.totalorder %s219, %s220
      %p229 = scmp.eq.s32.totalorder %s36, 0
      %p230 = por %p228, %p229
      %p231 = scmp.ne.s32.totalorder %s219, %s220
      %p232 = scmp.eq.s32.totalorder %s37, 1
      %p233 = por %p231, %p232
      %p235 = scmp.ne.s32.totalorder %s220, %s234
      %p236 = scmp.eq.s32.totalorder %s37, 0
      %p237 = por %p235, %p236
      %s239 = sadd.s32 %s238, 1
      %p242 = scmp.eq.s32.totalorder %s31, 1
      %p243 = scmp.ne.s32.totalorder %s238, %s240
      %p244 = scmp.eq.s32.totalorder %s31, 0
      %p245 = por %p243, %p244
      %p246 = scmp.ne.s32.totalorder %s238, %s240
      %p247 = scmp.eq.s32.totalorder %s36, 1
      %p248 = por %p246, %p247
      %p249 = scmp.ne.s32.totalorder %s240, %s241
      %p250 = scmp.eq.s32.totalorder %s36, 0
      %p251 = por %p249, %p250
      %p252 = scmp.ne.s32.totalorder %s240, %s241
      %p253 = scmp.eq.s32.totalorder %s37, 1
      %p254 = por %p252, %p253
      %p256 = scmp.ne.s32.totalorder %s241, %s255
      %p257 = scmp.eq.s32.totalorder %s37, 0
      %p258 = por %p256, %p257
      %s260 = sadd.s32 %s259, 1
      %p263 = scmp.eq.s32.totalorder %s31, 1
      %p264 = scmp.ne.s32.totalorder %s259, %s261
      %p265 = scmp.eq.s32.totalorder %s31, 0
      %p266 = por %p264, %p265
      %p267 = scmp.ne.s32.totalorder %s259, %s261
      %p268 = scmp.eq.s32.totalorder %s36, 1
      %p269 = por %p267, %p268
      %p270 = scmp.ne.s32.totalorder %s261, %s262
      %p271 = scmp.eq.s32.totalorder %s36, 0
      %p272 = por %p270, %p271
      %p273 = scmp.ne.s32.totalorder %s261, %s262
      %p274 = scmp.eq.s32.totalorder %s37, 1
      %p275 = por %p273, %p274
      %p277 = scmp.ne.s32.totalorder %s262, %s276
      %p278 = scmp.eq.s32.totalorder %s37, 0
      %p279 = por %p277, %p278
      %s281 = sadd.s32 %s280, 1
      %p284 = scmp.eq.s32.totalorder %s31, 1
      %p285 = scmp.ne.s32.totalorder %s280, %s282
      %p286 = scmp.eq.s32.totalorder %s31, 0
      %p287 = por %p285, %p286
      %p288 = scmp.ne.s32.totalorder %s280, %s282
      %p289 = scmp.eq.s32.totalorder %s36, 1
      %p290 = por %p288, %p289
      %p291 = scmp.ne.s32.totalorder %s282, %s283
      %p292 = scmp.eq.s32.totalorder %s36, 0
      %p293 = por %p291, %p292
      %p294 = scmp.ne.s32.totalorder %s282, %s283
      %p295 = scmp.eq.s32.totalorder %s37, 1
      %p296 = por %p294, %p295
      %p298 = scmp.ne.s32.totalorder %s283, %s297
      %p299 = scmp.eq.s32.totalorder %s37, 0
      %p300 = por %p298, %p299
      %s302 = sadd.s32 %s301, 1
      %p305 = scmp.eq.s32.totalorder %s31, 1
      %p306 = scmp.ne.s32.totalorder %s301, %s303
      %p307 = scmp.eq.s32.totalorder %s31, 0
      %p308 = por %p306, %p307
      %p309 = scmp.ne.s32.totalorder %s301, %s303
      %p310 = scmp.eq.s32.totalorder %s36, 1
      %p311 = por %p309, %p310
      %p312 = scmp.ne.s32.totalorder %s303, %s304
      %p313 = scmp.eq.s32.totalorder %s36, 0
      %p314 = por %p312, %p313
      %p315 = scmp.ne.s32.totalorder %s303, %s304
      %p316 = scmp.eq.s32.totalorder %s37, 1
      %p317 = por %p315, %p316
      %p319 = scmp.ne.s32.totalorder %s304, %s318
      %p320 = scmp.eq.s32.totalorder %s37, 0
      %p321 = por %p319, %p320
      %s323 = sadd.s32 %s322, 1
      %p326 = scmp.eq.s32.totalorder %s31, 1
      %p327 = scmp.ne.s32.totalorder %s322, %s324
      %p328 = scmp.eq.s32.totalorder %s31, 0
      %p329 = por %p327, %p328
      %p330 = scmp.ne.s32.totalorder %s322, %s324
      %p331 = scmp.eq.s32.totalorder %s36, 1
      %p332 = por %p330, %p331
      %p333 = scmp.ne.s32.totalorder %s324, %s325
      %p334 = scmp.eq.s32.totalorder %s36, 0
      %p335 = por %p333, %p334
      %p336 = scmp.ne.s32.totalorder %s324, %s325
      %p337 = scmp.eq.s32.totalorder %s37, 1
      %p338 = por %p336, %p337
      %p340 = scmp.ne.s32.totalorder %s325, %s339
      %p341 = scmp.eq.s32.totalorder %s37, 0
      %p342 = por %p340, %p341
      %s343 = ssub.s32 %s31, %s38
      %p344 = scmp.eq.s32.totalorder %s343, 0
      %s346 = sadd.s32 %s345, 1
      %s347 = scalar_select %p344, %s345, %s346
      %p350 = pneg %p344
      %p351 = scmp.eq.s32.totalorder %s31, 1
      %p352 = por %p350, %p351
      %p353 = scmp.ne.s32.totalorder %s345, %s348
      %p354 = scmp.eq.s32.totalorder %s31, 0
      %p355 = por %p353, %p354
      %p356 = scmp.ne.s32.totalorder %s345, %s348
      %p357 = scmp.eq.s32.totalorder %s36, 1
      %p358 = por %p356, %p357
      %p359 = scmp.ne.s32.totalorder %s348, %s349
      %p360 = scmp.eq.s32.totalorder %s36, 0
      %p361 = por %p359, %p360
      %p362 = scmp.ne.s32.totalorder %s348, %s349
      %p363 = scmp.eq.s32.totalorder %s37, 1
      %p364 = por %p362, %p363
      %p366 = scmp.ne.s32.totalorder %s349, %s365
      %p367 = scmp.eq.s32.totalorder %s37, 0
      %p368 = por %p366, %p367
      %p369 = scmp.le.s32.totalorder 1, %s31
      %p370 = scmp.lt.s32.totalorder %s31, 3
      %p371 = pnand %p369, %p370
      %p372 = pneg %p371
      // Predicated region
      $region9: #{tpu_custom_call.1} parent=5 // pred_check
        _
      $region10: #{tpu_custom_call.1} parent=5 // pred_check_branch
        %374 = sbr.rel (%p371) target = $region12
      $region11: #{tpu_custom_call.1} parent=5 // pred_region
        %s375 = ssub.s32 %s31, 1
        // Predicated region
        $region13: #{tpu_custom_call.1} parent=11 // pred_check
          %p376 = pneg %p104
        $region14: #{tpu_custom_call.1} parent=11 // pred_check_branch
          %378 = sbr.rel (%p376) target = $region16
        $region15: #{tpu_custom_call.1} parent=11 // pred_region
          _
        $region16: #{tpu_custom_call.1} parent=11 // pred_fallthru
          _
        // Predicated region
        $region17: #{tpu_custom_call.1} parent=11 // pred_check
          %p379 = pneg %p125
        $region18: #{tpu_custom_call.1} parent=11 // pred_check_branch
          %381 = sbr.rel (%p379) target = $region20
        $region19: #{tpu_custom_call.1} parent=11 // pred_region
          _
        $region20: #{tpu_custom_call.1} parent=11 // pred_fallthru
          _
        // Predicated region
        $region21: #{tpu_custom_call.1} parent=11 // pred_check
          %p382 = pneg %p146
        $region22: #{tpu_custom_call.1} parent=11 // pred_check_branch
          %384 = sbr.rel (%p382) target = $region24
        $region23: #{tpu_custom_call.1} parent=11 // pred_region
          _
        $region24: #{tpu_custom_call.1} parent=11 // pred_fallthru
          _
        // Predicated region
        $region25: #{tpu_custom_call.1} parent=11 // pred_check
          %p385 = pneg %p167
        $region26: #{tpu_custom_call.1} parent=11 // pred_check_branch
          %387 = sbr.rel (%p385) target = $region28
        $region27: #{tpu_custom_call.1} parent=11 // pred_region
          _
        $region28: #{tpu_custom_call.1} parent=11 // pred_fallthru
          _
        // Predicated region
        $region29: #{tpu_custom_call.1} parent=11 // pred_check
          %p388 = pneg %p188
        $region30: #{tpu_custom_call.1} parent=11 // pred_check_branch
          %390 = sbr.rel (%p388) target = $region32
        $region31: #{tpu_custom_call.1} parent=11 // pred_region
          %392 = vsyncadd [#allocation6], 0
          %s393 = sshll.u32 %s6, 4
          %s394 = int_to_ptr.hbm [resolvable:$true] %s393
          %s395 = sshll.u32 [#allocation7], 4
          %s396 = int_to_ptr.vmem [resolvable:$true] %s395
          %401 = dma.hbm_to_vmem [thread:$0]  %s394, 512, %s396, [#allocation6], 128, 128, 8
        $region32: #{tpu_custom_call.1} parent=11 // pred_fallthru
          _
        // Predicated region
        $region33: #{tpu_custom_call.1} parent=11 // pred_check
          %p402 = pneg %p209
        $region34: #{tpu_custom_call.1} parent=11 // pred_check_branch
          %404 = sbr.rel (%p402) target = $region36
        $region35: #{tpu_custom_call.1} parent=11 // pred_region
          _
        $region36: #{tpu_custom_call.1} parent=11 // pred_fallthru
          _
        // Predicated region
        $region37: #{tpu_custom_call.1} parent=11 // pred_check
          %p405 = pneg %p230
        $region38: #{tpu_custom_call.1} parent=11 // pred_check_branch
          %407 = sbr.rel (%p405) target = $region40
        $region39: #{tpu_custom_call.1} parent=11 // pred_region
          %409 = vsyncadd [#allocation9], 0
          %s410 = sshll.u32 %s8, 4
          %s411 = int_to_ptr.hbm [resolvable:$true] %s410
          %s412 = sshll.u32 [#allocation8], 4
          %s413 = int_to_ptr.vmem [resolvable:$true] %s412
          %418 = dma.hbm_to_vmem [thread:$0]  %s411, 512, %s413, [#allocation9], 128, 128, 8
        $region40: #{tpu_custom_call.1} parent=11 // pred_fallthru
          _
        // Predicated region
        $region41: #{tpu_custom_call.1} parent=11 // pred_check
          %p419 = pneg %p251
        $region42: #{tpu_custom_call.1} parent=11 // pred_check_branch
          %421 = sbr.rel (%p419) target = $region44
        $region43: #{tpu_custom_call.1} parent=11 // pred_region
          _
        $region44: #{tpu_custom_call.1} parent=11 // pred_fallthru
          _
        // Predicated region
        $region45: #{tpu_custom_call.1} parent=11 // pred_check
          %p422 = pneg %p272
        $region46: #{tpu_custom_call.1} parent=11 // pred_check_branch
          %424 = sbr.rel (%p422) target = $region48
        $region47: #{tpu_custom_call.1} parent=11 // pred_region
          %426 = vsyncadd [#allocation9], 0
          %s427 = sshll.u32 %s10, 4
          %s428 = int_to_ptr.hbm [resolvable:$true] %s427
          %s429 = sshll.u32 [#allocation10], 4
          %s430 = int_to_ptr.vmem [resolvable:$true] %s429
          %435 = dma.hbm_to_vmem [thread:$0]  %s428, 512, %s430, [#allocation9], 128, 128, 8
        $region48: #{tpu_custom_call.1} parent=11 // pred_fallthru
          _
        // Predicated region
        $region49: #{tpu_custom_call.1} parent=11 // pred_check
          %p436 = pneg %p293
        $region50: #{tpu_custom_call.1} parent=11 // pred_check_branch
          %438 = sbr.rel (%p436) target = $region52
        $region51: #{tpu_custom_call.1} parent=11 // pred_region
          _
        $region52: #{tpu_custom_call.1} parent=11 // pred_fallthru
          _
        // Predicated region
        $region53: #{tpu_custom_call.1} parent=11 // pred_check
          %p439 = pneg %p314
        $region54: #{tpu_custom_call.1} parent=11 // pred_check_branch
          %441 = sbr.rel (%p439) target = $region56
        $region55: #{tpu_custom_call.1} parent=11 // pred_region
          %443 = vsyncadd [#allocation12], 0
          %s444 = sshll.u32 %s12, 4
          %s445 = int_to_ptr.hbm [resolvable:$true] %s444
          %s446 = sshll.u32 [#allocation11], 4
          %s447 = int_to_ptr.vmem [resolvable:$true] %s446
          %452 = dma.hbm_to_vmem [thread:$0]  %s445, 512, %s447, [#allocation12], 128, 128, 8
        $region56: #{tpu_custom_call.1} parent=11 // pred_fallthru
          _
        // Predicated region
        $region57: #{tpu_custom_call.1} parent=11 // pred_check
          %p453 = pneg %p335
        $region58: #{tpu_custom_call.1} parent=11 // pred_check_branch
          %455 = sbr.rel (%p453) target = $region60
        $region59: #{tpu_custom_call.1} parent=11 // pred_region
          _
        $region60: #{tpu_custom_call.1} parent=11 // pred_fallthru
          _
      $region12: #{tpu_custom_call.1} parent=5 // pred_fallthru
        _
      %p456 = scmp.lt.s32.totalorder %s31, 2
      // Predicated region
      $region61: #{tpu_custom_call.1} parent=5 // pred_check
        %p457 = pneg %p456
      $region62: #{tpu_custom_call.1} parent=5 // pred_check_branch
        %459 = sbr.rel (%p457) target = $region64
      $region63: #{tpu_custom_call.1} parent=5 // pred_region
        // Predicated region
        $region65: #{tpu_custom_call.1} parent=63 // pred_check
          %p460 = pneg %p51
        $region66: #{tpu_custom_call.1} parent=63 // pred_check_branch
          %462 = sbr.rel (%p460) target = $region68
        $region67: #{tpu_custom_call.1} parent=63 // pred_region
          %s463 = sand.u32 %s41, 1
          %s464 = scalar_lea.sflag [#allocation3], %s463
          %s465 = sand.u32 %s41, 1
          %s466 = smul.addr %s465, 8
          %s467 = scalar_lea.vmem [#allocation2], %s466
          %469 = vsyncadd %s464, 0
          %s470 = smul.addr %s31, 8
          %s471 = scalar_lea.hbm %s0, %s470
          %s473 = sshll.u32 %s471, 4
          %s474 = int_to_ptr.hbm [resolvable:$true] %s473
          %s475 = sshll.u32 %s467, 4
          %s476 = int_to_ptr.vmem [resolvable:$true] %s475
          %478 = dma.hbm_to_vmem [thread:$0]  %s474, 128, %s476, %s464
        $region68: #{tpu_custom_call.1} parent=63 // pred_fallthru
          _
        // Predicated region
        $region69: #{tpu_custom_call.1} parent=63 // pred_check
          %p479 = pneg %p77
        $region70: #{tpu_custom_call.1} parent=63 // pred_check_branch
          %481 = sbr.rel (%p479) target = $region72
        $region71: #{tpu_custom_call.1} parent=63 // pred_region
          %s482 = sand.u32 %s31, 1
          %s483 = scalar_lea.sflag [#allocation6], %s482
          %s484 = sand.u32 %s67, 1
          %s485 = smul.addr %s484, 16
          %s486 = scalar_lea.vmem [#allocation5], %s485
          %488 = vsyncadd %s483, 0
          %s489 = smul.addr %s31, 2
          %s490 = smul.addr %s489, 8
          %s491 = scalar_lea.hbm %s1, %s490
          %s492 = sshll.u32 %s491, 4
          %s493 = int_to_ptr.hbm [resolvable:$true] %s492
          %s494 = sshll.u32 %s486, 4
          %s495 = int_to_ptr.vmem [resolvable:$true] %s494
          %500 = dma.hbm_to_vmem [thread:$0]  %s493, 256, %s495, %s483, 128, 128, 8
        $region72: #{tpu_custom_call.1} parent=63 // pred_fallthru
          _
      $region64: #{tpu_custom_call.1} parent=5 // pred_fallthru
        _
      %p501 = scmp.le.s32.totalorder 1, %s31
      %p502 = scmp.lt.s32.totalorder %s31, 3
      %p503 = pnand %p501, %p502
      %p504 = pneg %p503
      // Predicated region
      $region73: #{tpu_custom_call.1} parent=5 // pred_check
        _
      $region74: #{tpu_custom_call.1} parent=5 // pred_check_branch
        %506 = sbr.rel (%p503) target = $region76
      $region75: #{tpu_custom_call.1} parent=5 // pred_region
        %s507 = ssub.s32 %s31, 1
        %s508 = sand.u32 %s44, 1
        %s509 = scalar_lea.sflag [#allocation3], %s508
        %s510 = sand.u32 %s44, 1
        %s511 = smul.addr %s510, 8
        %s512 = scalar_lea.vmem [#allocation2], %s511
        // Predicated region
        $region77: #{tpu_custom_call.1} parent=75 // pred_check
          %p513 = pneg %p57
        $region78: #{tpu_custom_call.1} parent=75 // pred_check_branch
          %515 = sbr.rel (%p513) target = $region80
        $region79: #{tpu_custom_call.1} parent=75 // pred_region
          %517 = dma.done %s509, 128
        $region80: #{tpu_custom_call.1} parent=75 // pred_fallthru
          _
        %s518 = sand.u32 %s36, 1
        %s519 = scalar_lea.sflag [#allocation6], %s518
        %s520 = sand.u32 %s70, 1
        %s521 = smul.addr %s520, 16
        %s522 = scalar_lea.vmem [#allocation5], %s521
        // Predicated region
        $region81: #{tpu_custom_call.1} parent=75 // pred_check
          %p523 = pneg %p83
        $region82: #{tpu_custom_call.1} parent=75 // pred_check_branch
          %525 = sbr.rel (%p523) target = $region84
        $region83: #{tpu_custom_call.1} parent=75 // pred_region
          %527 = dma.done %s519, 256
        $region84: #{tpu_custom_call.1} parent=75 // pred_fallthru
          _
        // Predicated region
        $region85: #{tpu_custom_call.1} parent=75 // pred_check
          %p528 = pneg %p188
        $region86: #{tpu_custom_call.1} parent=75 // pred_check_branch
          %530 = sbr.rel (%p528) target = $region88
        $region87: #{tpu_custom_call.1} parent=75 // pred_region
          %532 = dma.done [#allocation6], 512
        $region88: #{tpu_custom_call.1} parent=75 // pred_fallthru
          _
        // Predicated region
        $region89: #{tpu_custom_call.1} parent=75 // pred_check
          %p533 = pneg %p230
        $region90: #{tpu_custom_call.1} parent=75 // pred_check_branch
          %535 = sbr.rel (%p533) target = $region92
        $region91: #{tpu_custom_call.1} parent=75 // pred_region
          %537 = dma.done [#allocation9], 512
        $region92: #{tpu_custom_call.1} parent=75 // pred_fallthru
          _
        // Predicated region
        $region93: #{tpu_custom_call.1} parent=75 // pred_check
          %p538 = pneg %p272
        $region94: #{tpu_custom_call.1} parent=75 // pred_check_branch
          %540 = sbr.rel (%p538) target = $region96
        $region95: #{tpu_custom_call.1} parent=75 // pred_region
          %542 = dma.done [#allocation9], 512
        $region96: #{tpu_custom_call.1} parent=75 // pred_fallthru
          _
        // Predicated region
        $region97: #{tpu_custom_call.1} parent=75 // pred_check
          %p543 = pneg %p314
        $region98: #{tpu_custom_call.1} parent=75 // pred_check_branch
          %545 = sbr.rel (%p543) target = $region100
        $region99: #{tpu_custom_call.1} parent=75 // pred_region
          %547 = dma.done [#allocation12], 512
        $region100: #{tpu_custom_call.1} parent=75 // pred_fallthru
          _
        %s548 = sand.u32 %s44, 1
        %s549 = scalar_lea.sflag [#allocation3], %s548
        %s550 = sand.u32 %s44, 1
        %s551 = smul.addr %s550, 8
        %s552 = scalar_lea.vmem [#allocation2], %s551
        %p553 = pneg %p57
        %p554 = pneg %p54
        %s555 = sand.u32 %s36, 1
        %s556 = scalar_lea.sflag [#allocation6], %s555
        %s557 = sand.u32 %s70, 1
        %s558 = smul.addr %s557, 16
        %s559 = scalar_lea.vmem [#allocation5], %s558
        %p560 = pneg %p83
        %p561 = pneg %p80
        %p562 = pneg %p104
        %p563 = pneg %p101
        %p564 = pneg %p125
        %p565 = pneg %p122
        %p566 = pneg %p146
        %p567 = pneg %p143
        %p568 = pneg %p167
        %p569 = pneg %p164
        %p570 = pneg %p188
        %p571 = pneg %p185
        %p572 = pneg %p209
        %p573 = pneg %p206
        %p574 = pneg %p230
        %p575 = pneg %p227
        %p576 = pneg %p251
        %p577 = pneg %p248
        %p578 = pneg %p272
        %p579 = pneg %p269
        %p580 = pneg %p293
        %p581 = pneg %p290
        %p582 = pneg %p314
        %p583 = pneg %p311
        %p584 = pneg %p335
        %p585 = pneg %p332
        %p586 = pneg %p361
        %p587 = pneg %p358
        %s588 = sand.u32 %s348, 1
        %s589 = scalar_lea.sflag [#allocation4], %s588
        %s590 = sand.u32 %s348, 1
        %s591 = smul.addr %s590, 8
        %s592 = scalar_lea.vmem [#allocation13], %s591
        %v593 = vld [vmem:[%s512] sm:$0xff]
        %v594 = vld [vmem:[%s522] sm:$0xff]
        %v595 = vld [vmem:[%s522 + $0x8] sm:$0xff]
        %v596 = vld [vmem:[%s2] sm:$0x1]
        %v597 = vld [vmem:[%s3] sm:$0x1]
        %vm598 = vcmask 261120
        %v599 = vsel %vm598, %v593, 0.0
        %600 = vadd.xlane.f32.xlu0 %v599
        %v601 = vpop.xlane.xlu0 %600
        %v602 = vrcp.pop 32.0
        %v603 = vmul.f32 32.0, %v602
        %v604 = vsub.f32 1.0, %v603
        %v605 = vmul.f32 %v602, %v604
        %v606 = vadd.f32 %v602, %v605
        %vm607 = vweird.f32 %v602
        %v608 = vsel %vm607, %v602, %v606
        %v609 = vmul.f32 %v601, %v608
        %v610 = vsub.f32 %v593, %v609
        %v611 = vmul.f32 %v610, %v610
        %v612 = vsel %vm598, %v611, 0.0
        %613 = vadd.xlane.f32.xlu0 %v612
        %v614 = vpop.xlane.xlu0 %613
        %v615 = vmul.f32 %v614, %v608
        %v616 = vadd.f32 %v615, 1e-05
        %v617 = vrsqrt.pop %v616
        %v618 = vmul.f32 %v617, %v616
        %v619 = vmul.f32 %v618, %v617
        %v620 = vmul.f32 0.5, %v619
        %v621 = vsub.f32 1.5, %v620
        %v622 = vmul.f32 %v617, %v621
        %vm623 = vweird.f32 %v616
        %vm624 = vweird.f32 %v617
        %vm625 = vmor %vm623, %vm624
        %v626 = vsel %vm625, %v617, %v622
        %v627 = vmul.f32 %v610, %v626
        %v629 = vperm.slane %v596, 0
        %v631 = vmul.f32 %v627, %v629
        %v633 = vperm.slane %v597, 0
        %v635 = vadd.f32 %v631, %v633
        %v636 = vld [vmem:[%s4] sm:$0x1]
        %v637 = vld [vmem:[%s5] sm:$0x1]
        %v638 = vsel %vm598, %v594, 0.0
        %639 = vadd.xlane.f32.xlu0 %v638
        %v640 = vpop.xlane.xlu0 %639
        %v641 = vsel %vm598, %v595, 0.0
        %642 = vadd.xlane.f32.xlu0 %v641
        %v643 = vpop.xlane.xlu0 %642
        %v644 = vmul.f32 %v640, %v608
        %v645 = vmul.f32 %v643, %v608
        %v646 = vsub.f32 %v594, %v644
        %v647 = vsub.f32 %v595, %v645
        %v648 = vmul.f32 %v646, %v646
        %v649 = vmul.f32 %v647, %v647
        %v650 = vsel %vm598, %v648, 0.0
        %651 = vadd.xlane.f32.xlu0 %v650
        %v652 = vpop.xlane.xlu0 %651
        %v653 = vsel %vm598, %v649, 0.0
        %654 = vadd.xlane.f32.xlu0 %v653
        %v655 = vpop.xlane.xlu0 %654
        %v656 = vmul.f32 %v652, %v608
        %v657 = vmul.f32 %v655, %v608
        %v658 = vadd.f32 %v656, 1e-05
        %v659 = vadd.f32 %v657, 1e-05
        %v660 = vrsqrt.pop %v658
        %v661 = vmul.f32 %v660, %v658
        %v662 = vmul.f32 %v661, %v660
        %v663 = vmul.f32 0.5, %v662
        %v664 = vsub.f32 1.5, %v663
        %v665 = vmul.f32 %v660, %v664
        %vm666 = vweird.f32 %v658
        %vm667 = vweird.f32 %v660
        %vm668 = vmor %vm666, %vm667
        %v669 = vsel %vm668, %v660, %v665
        %v670 = vrsqrt.pop %v659
        %v671 = vmul.f32 %v670, %v659
        %v672 = vmul.f32 %v671, %v670
        %v673 = vmul.f32 0.5, %v672
        %v674 = vsub.f32 1.5, %v673
        %v675 = vmul.f32 %v670, %v674
        %vm676 = vweird.f32 %v659
        %vm677 = vweird.f32 %v670
        %vm678 = vmor %vm676, %vm677
        %v679 = vsel %vm678, %v670, %v675
        %v680 = vmul.f32 %v646, %v669
        %v681 = vmul.f32 %v647, %v679
        %v683 = vperm.slane %v636, 0
        %v685 = vmul.f32 %v680, %v683
        %v686 = vmul.f32 %v681, %v683
        %v688 = vperm.slane %v637, 0
        %v690 = vadd.f32 %v685, %v688
        %v691 = vadd.f32 %v686, %v688
        %v692 = vld [vmem:[#allocation7] sm:$0xff]
        %v693 = vld [vmem:[#allocation7 + $0x8] sm:$0xff]
        %v694 = vld [vmem:[#allocation7 + $0x10] sm:$0xff]
        %v695 = vld [vmem:[#allocation7 + $0x18] sm:$0xff]
        %v696 = vld [vmem:[%s7] sm:$0x1]
        %v698 = vperm.slane %v696, 0
        %v701 = vsel %vm598, %v635, 0
        %703 = vmatpush.msra.mxu0 0.0
        %704 = vmatpush.msra.mxu0 0.0
        %705 = vmatpush.msra.mxu0 0.0
        %706 = vmatpush.msra.mxu0 0.0
        %707 = vmatpush.msra.mxu0 0.0
        %708 = vmatpush.msra.mxu0 0.0
        %709 = vmatpush.msra.mxu0 0.0
        %710 = vmatpush.msra.mxu0 0.0
        %711 = vmatpush.msra.mxu0 0.0
        %712 = vmatpush.msra.mxu0 0.0
        %713 = vmatpush.msra.mxu0 0.0
        %714 = vmatpush.msra.mxu0 0.0
        %715 = vmatpush.msra.mxu0 %v695
        %716 = vmatpush.msra.mxu0 %v694
        %717 = vmatpush.msra.mxu0 %v693
        %718 = vmatpush.msra.mxu0 %v692
        %719 = vmatmul.f32.gmra.mxu0 %v701
        %v720 = vpop.f32.mrf.mxu0
        %v721 = vadd.f32 %v698, %v720
        %722 = vdwg.mxu0
        %v723 = vld [vmem:[#allocation8] sm:$0xff]
        %v724 = vld [vmem:[#allocation8 + $0x8] sm:$0xff]
        %v725 = vld [vmem:[#allocation8 + $0x10] sm:$0xff]
        %v726 = vld [vmem:[#allocation8 + $0x18] sm:$0xff]
        %v727 = vld [vmem:[%s9] sm:$0x1]
        %v729 = vperm.slane %v727, 0
        %v732 = vsel %vm598, %v690, 0
        %v735 = vsel %vm598, %v691, 0
        %737 = vmatpush.msra.mxu0 0.0
        %738 = vmatpush.msra.mxu0 0.0
        %739 = vmatpush.msra.mxu0 0.0
        %740 = vmatpush.msra.mxu0 0.0
        %741 = vmatpush.msra.mxu0 0.0
        %742 = vmatpush.msra.mxu0 0.0
        %743 = vmatpush.msra.mxu0 0.0
        %744 = vmatpush.msra.mxu0 0.0
        %745 = vmatpush.msra.mxu0 0.0
        %746 = vmatpush.msra.mxu0 0.0
        %747 = vmatpush.msra.mxu0 0.0
        %748 = vmatpush.msra.mxu0 0.0
        %749 = vmatpush.msra.mxu0 %v726
        %750 = vmatpush.msra.mxu0 %v725
        %751 = vmatpush.msra.mxu0 %v724
        %752 = vmatpush.msra.mxu0 %v723
        %753 = vmatmul.f32.gmra.mxu0 %v732
        %v754 = vpop.f32.mrf.mxu0
        %v755 = vadd.f32 %v729, %v754
        %756 = vmatmul.f32.gmra.mxu0 %v735
        %v757 = vpop.f32.mrf.mxu0
        %v758 = vadd.f32 %v729, %v757
        %759 = vdwg.mxu0
        %v760 = vld [vmem:[#allocation10] sm:$0xff]
        %v761 = vld [vmem:[#allocation10 + $0x8] sm:$0xff]
        %v762 = vld [vmem:[#allocation10 + $0x10] sm:$0xff]
        %v763 = vld [vmem:[#allocation10 + $0x18] sm:$0xff]
        %v764 = vld [vmem:[%s11] sm:$0x1]
        %v766 = vperm.slane %v764, 0
        %768 = vmatpush.msra.mxu0 0.0
        %769 = vmatpush.msra.mxu0 0.0
        %770 = vmatpush.msra.mxu0 0.0
        %771 = vmatpush.msra.mxu0 0.0
        %772 = vmatpush.msra.mxu0 0.0
        %773 = vmatpush.msra.mxu0 0.0
        %774 = vmatpush.msra.mxu0 0.0
        %775 = vmatpush.msra.mxu0 0.0
        %776 = vmatpush.msra.mxu0 0.0
        %777 = vmatpush.msra.mxu0 0.0
        %778 = vmatpush.msra.mxu0 0.0
        %779 = vmatpush.msra.mxu0 0.0
        %780 = vmatpush.msra.mxu0 %v763
        %781 = vmatpush.msra.mxu0 %v762
        %782 = vmatpush.msra.mxu0 %v761
        %783 = vmatpush.msra.mxu0 %v760
        %784 = vmatmul.f32.gmra.mxu0 %v732
        %v785 = vpop.f32.mrf.mxu0
        %v786 = vadd.f32 %v766, %v785
        %787 = vmatmul.f32.gmra.mxu0 %v735
        %v788 = vpop.f32.mrf.mxu0
        %v789 = vadd.f32 %v766, %v788
        %790 = vdwg.mxu0
        %v791 = vmul.f32 %v721, 0.35355338
        %v792 = vld [vmem:[#allocation11] sm:$0xff]
        %v793 = vld [vmem:[#allocation11 + $0x8] sm:$0xff]
        %v794 = vld [vmem:[#allocation11 + $0x10] sm:$0xff]
        %v795 = vld [vmem:[#allocation11 + $0x18] sm:$0xff]
        %v796 = vld [vmem:[%s13] sm:$0x1]
        %v798 = vperm.slane %v796, 0
        %vm800 = vcmask 64512
        %v802 = vsel %vm800, %v791, 0
        %v805 = vsel %vm800, %v755, 0
        %v808 = vsel %vm800, %v758, 0
        %810 = vmatpush.xpose.msra.mxu0 0.0
        %811 = vmatpush.xpose.msra.mxu0 0.0
        %812 = vmatpush.xpose.msra.mxu0 0.0
        %813 = vmatpush.xpose.msra.mxu0 0.0
        %814 = vmatpush.xpose.msra.mxu0 0.0
        %815 = vmatpush.xpose.msra.mxu0 0.0
        %816 = vmatpush.xpose.msra.mxu0 0.0
        %817 = vmatpush.xpose.msra.mxu0 0.0
        %818 = vmatpush.xpose.msra.mxu0 0.0
        %819 = vmatpush.xpose.msra.mxu0 0.0
        %820 = vmatpush.xpose.msra.mxu0 0.0
        %821 = vmatpush.xpose.msra.mxu0 0.0
        %822 = vmatpush.xpose.msra.mxu0 0.0
        %823 = vmatpush.xpose.msra.mxu0 0.0
        %824 = vmatpush.xpose.msra.mxu0 %v808
        %825 = vmatpush.xpose.msra.mxu0 %v805
        %826 = vmatmul.f32.gmra.mxu0 %v802
        %v827 = vpop.f32.mrf.mxu0
        %v828 = vadd.f32 0.0, %v827
        %829 = vdwg.mxu0
        %vm830 = vcmask 130048
        %v831 = vsel %vm830, %v828, -inf
        %832 = vmax.xlane.f32.xlu0 %v831
        %v833 = vpop.xlane.xlu0 %832
        %v834 = vsub.f32 %v828, %v833
        %v835 = vmul.f32 %v834, 1.442695
        %v836 = vpow.pop %v835
        %v837 = vsel %vm830, %v836, 0.0
        %838 = vadd.xlane.f32.xlu0 %v837
        %v839 = vpop.xlane.xlu0 %838
        %v840 = vrcp.pop %v839
        %v841 = vmul.f32 %v836, %v840
        %v843 = vsel %vm830, %v841, 0
        %845 = vmatpush.msra.mxu0 0.0
        %846 = vmatpush.msra.mxu0 0.0
        %847 = vmatpush.msra.mxu0 0.0
        %848 = vmatpush.msra.mxu0 0.0
        %849 = vmatpush.msra.mxu0 0.0
        %850 = vmatpush.msra.mxu0 0.0
        %851 = vmatpush.msra.mxu0 0.0
        %852 = vmatpush.msra.mxu0 0.0
        %853 = vmatpush.msra.mxu0 0.0
        %854 = vmatpush.msra.mxu0 0.0
        %855 = vmatpush.msra.mxu0 0.0
        %856 = vmatpush.msra.mxu0 0.0
        %857 = vmatpush.msra.mxu0 0.0
        %858 = vmatpush.msra.mxu0 0.0
        %859 = vmatpush.msra.mxu0 %v789
        %860 = vmatpush.msra.mxu0 %v786
        %861 = vmatmul.f32.gmra.mxu0 %v843
        %v862 = vpop.f32.mrf.mxu0
        %v863 = vadd.f32 0.0, %v862
        %864 = vdwg.mxu0
        %v866 = vsel %vm800, %v863, 0
        %868 = vmatpush.msra.mxu0 0.0
        %869 = vmatpush.msra.mxu0 0.0
        %870 = vmatpush.msra.mxu0 0.0
        %871 = vmatpush.msra.mxu0 0.0
        %872 = vmatpush.msra.mxu0 0.0
        %873 = vmatpush.msra.mxu0 0.0
        %874 = vmatpush.msra.mxu0 0.0
        %875 = vmatpush.msra.mxu0 0.0
        %876 = vmatpush.msra.mxu0 0.0
        %877 = vmatpush.msra.mxu0 0.0
        %878 = vmatpush.msra.mxu0 0.0
        %879 = vmatpush.msra.mxu0 0.0
        %880 = vmatpush.msra.mxu0 0.0
        %881 = vmatpush.msra.mxu0 0.0
        %882 = vmatpush.msra.mxu0 0.0
        %883 = vmatpush.msra.mxu0 %v792
        %884 = vmatmul.f32.gmra.mxu0 %v866
        %v885 = vpop.f32.mrf.mxu0
        %v886 = vadd.f32 0.0, %v885
        %887 = vdwg.mxu0
        %v888 = vadd.f32 %v798, %v886
        %889 = vrot.lane.b32.xlu0 %v791, 120
        %v890 = vpop.permute.xlu0 %889
        %891 = vrot.lane.b32.xlu0 %v755, 120
        %v892 = vpop.permute.xlu0 %891
        %893 = vrot.lane.b32.xlu0 %v758, 120
        %v894 = vpop.permute.xlu0 %893
        %v895 = vsel %vm800, %v890, 0
        %v897 = vsel %vm800, %v892, 0
        %v899 = vsel %vm800, %v894, 0
        %901 = vmatpush.xpose.msra.mxu0 0.0
        %902 = vmatpush.xpose.msra.mxu0 0.0
        %903 = vmatpush.xpose.msra.mxu0 0.0
        %904 = vmatpush.xpose.msra.mxu0 0.0
        %905 = vmatpush.xpose.msra.mxu0 0.0
        %906 = vmatpush.xpose.msra.mxu0 0.0
        %907 = vmatpush.xpose.msra.mxu0 0.0
        %908 = vmatpush.xpose.msra.mxu0 0.0
        %909 = vmatpush.xpose.msra.mxu0 0.0
        %910 = vmatpush.xpose.msra.mxu0 0.0
        %911 = vmatpush.xpose.msra.mxu0 0.0
        %912 = vmatpush.xpose.msra.mxu0 0.0
        %913 = vmatpush.xpose.msra.mxu0 0.0
        %914 = vmatpush.xpose.msra.mxu0 0.0
        %915 = vmatpush.xpose.msra.mxu0 %v899
        %916 = vmatpush.xpose.msra.mxu0 %v897
        %917 = vmatmul.f32.gmra.mxu0 %v895
        %v918 = vpop.f32.mrf.mxu0
        %v919 = vadd.f32 0.0, %v918
        %920 = vdwg.mxu0
        %v921 = vsel %vm830, %v919, -inf
        %922 = vmax.xlane.f32.xlu0 %v921
        %v923 = vpop.xlane.xlu0 %922
        %v924 = vsub.f32 %v919, %v923
        %v925 = vmul.f32 %v924, 1.442695
        %v926 = vpow.pop %v925
        %v927 = vsel %vm830, %v926, 0.0
        %928 = vadd.xlane.f32.xlu0 %v927
        %v929 = vpop.xlane.xlu0 %928
        %v930 = vrcp.pop %v929
        %v931 = vmul.f32 %v926, %v930
        %934 = vrot.lane.b32.xlu0 %v786, 120
        %v935 = vpop.permute.xlu0 %934
        %936 = vrot.lane.b32.xlu0 %v789, 120
        %v937 = vpop.permute.xlu0 %936
        %v941 = vsel %vm830, %v931, 0
        %943 = vmatpush.msra.mxu0 0.0
        %944 = vmatpush.msra.mxu0 0.0
        %945 = vmatpush.msra.mxu0 0.0
        %946 = vmatpush.msra.mxu0 0.0
        %947 = vmatpush.msra.mxu0 0.0
        %948 = vmatpush.msra.mxu0 0.0
        %949 = vmatpush.msra.mxu0 0.0
        %950 = vmatpush.msra.mxu0 0.0
        %951 = vmatpush.msra.mxu0 0.0
        %952 = vmatpush.msra.mxu0 0.0
        %953 = vmatpush.msra.mxu0 0.0
        %954 = vmatpush.msra.mxu0 0.0
        %955 = vmatpush.msra.mxu0 0.0
        %956 = vmatpush.msra.mxu0 0.0
        %957 = vmatpush.msra.mxu0 %v937
        %958 = vmatpush.msra.mxu0 %v935
        %959 = vmatmul.f32.gmra.mxu0 %v941
        %v960 = vpop.f32.mrf.mxu0
        %v961 = vadd.f32 0.0, %v960
        %962 = vdwg.mxu0
        %v964 = vsel %vm800, %v961, 0
        %966 = vmatpush.msra.mxu0 0.0
        %967 = vmatpush.msra.mxu0 0.0
        %968 = vmatpush.msra.mxu0 0.0
        %969 = vmatpush.msra.mxu0 0.0
        %970 = vmatpush.msra.mxu0 0.0
        %971 = vmatpush.msra.mxu0 0.0
        %972 = vmatpush.msra.mxu0 0.0
        %973 = vmatpush.msra.mxu0 0.0
        %974 = vmatpush.msra.mxu0 0.0
        %975 = vmatpush.msra.mxu0 0.0
        %976 = vmatpush.msra.mxu0 0.0
        %977 = vmatpush.msra.mxu0 0.0
        %978 = vmatpush.msra.mxu0 0.0
        %979 = vmatpush.msra.mxu0 0.0
        %980 = vmatpush.msra.mxu0 0.0
        %981 = vmatpush.msra.mxu0 %v793
        %982 = vmatmul.f32.gmra.mxu0 %v964
        %v983 = vpop.f32.mrf.mxu0
        %v984 = vadd.f32 0.0, %v983
        %985 = vdwg.mxu0
        %v986 = vadd.f32 %v888, %v984
        %987 = vrot.lane.b32.xlu0 %v791, 112
        %v988 = vpop.permute.xlu0 %987
        %989 = vrot.lane.b32.xlu0 %v755, 112
        %v990 = vpop.permute.xlu0 %989
        %991 = vrot.lane.b32.xlu0 %v758, 112
        %v992 = vpop.permute.xlu0 %991
        %v993 = vsel %vm800, %v988, 0
        %v995 = vsel %vm800, %v990, 0
        %v997 = vsel %vm800, %v992, 0
        %999 = vmatpush.xpose.msra.mxu0 0.0
        %1000 = vmatpush.xpose.msra.mxu0 0.0
        %1001 = vmatpush.xpose.msra.mxu0 0.0
        %1002 = vmatpush.xpose.msra.mxu0 0.0
        %1003 = vmatpush.xpose.msra.mxu0 0.0
        %1004 = vmatpush.xpose.msra.mxu0 0.0
        %1005 = vmatpush.xpose.msra.mxu0 0.0
        %1006 = vmatpush.xpose.msra.mxu0 0.0
        %1007 = vmatpush.xpose.msra.mxu0 0.0
        %1008 = vmatpush.xpose.msra.mxu0 0.0
        %1009 = vmatpush.xpose.msra.mxu0 0.0
        %1010 = vmatpush.xpose.msra.mxu0 0.0
        %1011 = vmatpush.xpose.msra.mxu0 0.0
        %1012 = vmatpush.xpose.msra.mxu0 0.0
        %1013 = vmatpush.xpose.msra.mxu0 %v997
        %1014 = vmatpush.xpose.msra.mxu0 %v995
        %1015 = vmatmul.f32.gmra.mxu0 %v993
        %v1016 = vpop.f32.mrf.mxu0
        %v1017 = vadd.f32 0.0, %v1016
        %1018 = vdwg.mxu0
        %v1019 = vsel %vm830, %v1017, -inf
        %1020 = vmax.xlane.f32.xlu0 %v1019
        %v1021 = vpop.xlane.xlu0 %1020
        %v1022 = vsub.f32 %v1017, %v1021
        %v1023 = vmul.f32 %v1022, 1.442695
        %v1024 = vpow.pop %v1023
        %v1025 = vsel %vm830, %v1024, 0.0
        %1026 = vadd.xlane.f32.xlu0 %v1025
        %v1027 = vpop.xlane.xlu0 %1026
        %v1028 = vrcp.pop %v1027
        %v1029 = vmul.f32 %v1024, %v1028
        %1030 = vrot.lane.b32.xlu0 %v786, 112
        %v1031 = vpop.permute.xlu0 %1030
        %1032 = vrot.lane.b32.xlu0 %v789, 112
        %v1033 = vpop.permute.xlu0 %1032
        %v1037 = vsel %vm830, %v1029, 0
        %1039 = vmatpush.msra.mxu0 0.0
        %1040 = vmatpush.msra.mxu0 0.0
        %1041 = vmatpush.msra.mxu0 0.0
        %1042 = vmatpush.msra.mxu0 0.0
        %1043 = vmatpush.msra.mxu0 0.0
        %1044 = vmatpush.msra.mxu0 0.0
        %1045 = vmatpush.msra.mxu0 0.0
        %1046 = vmatpush.msra.mxu0 0.0
        %1047 = vmatpush.msra.mxu0 0.0
        %1048 = vmatpush.msra.mxu0 0.0
        %1049 = vmatpush.msra.mxu0 0.0
        %1050 = vmatpush.msra.mxu0 0.0
        %1051 = vmatpush.msra.mxu0 0.0
        %1052 = vmatpush.msra.mxu0 0.0
        %1053 = vmatpush.msra.mxu0 %v1033
        %1054 = vmatpush.msra.mxu0 %v1031
        %1055 = vmatmul.f32.gmra.mxu0 %v1037
        %v1056 = vpop.f32.mrf.mxu0
        %v1057 = vadd.f32 0.0, %v1056
        %1058 = vdwg.mxu0
        %v1060 = vsel %vm800, %v1057, 0
        %1062 = vmatpush.msra.mxu0 0.0
        %1063 = vmatpush.msra.mxu0 0.0
        %1064 = vmatpush.msra.mxu0 0.0
        %1065 = vmatpush.msra.mxu0 0.0
        %1066 = vmatpush.msra.mxu0 0.0
        %1067 = vmatpush.msra.mxu0 0.0
        %1068 = vmatpush.msra.mxu0 0.0
        %1069 = vmatpush.msra.mxu0 0.0
        %1070 = vmatpush.msra.mxu0 0.0
        %1071 = vmatpush.msra.mxu0 0.0
        %1072 = vmatpush.msra.mxu0 0.0
        %1073 = vmatpush.msra.mxu0 0.0
        %1074 = vmatpush.msra.mxu0 0.0
        %1075 = vmatpush.msra.mxu0 0.0
        %1076 = vmatpush.msra.mxu0 0.0
        %1077 = vmatpush.msra.mxu0 %v794
        %1078 = vmatmul.f32.gmra.mxu0 %v1060
        %v1079 = vpop.f32.mrf.mxu0
        %v1080 = vadd.f32 0.0, %v1079
        %1081 = vdwg.mxu0
        %v1082 = vadd.f32 %v986, %v1080
        %1083 = vrot.lane.b32.xlu0 %v791, 104
        %v1084 = vpop.permute.xlu0 %1083
        %1085 = vrot.lane.b32.xlu0 %v755, 104
        %v1086 = vpop.permute.xlu0 %1085
        %1087 = vrot.lane.b32.xlu0 %v758, 104
        %v1088 = vpop.permute.xlu0 %1087
        %v1089 = vsel %vm800, %v1084, 0
        %v1091 = vsel %vm800, %v1086, 0
        %v1093 = vsel %vm800, %v1088, 0
        %1095 = vmatpush.xpose.msra.mxu0 0.0
        %1096 = vmatpush.xpose.msra.mxu0 0.0
        %1097 = vmatpush.xpose.msra.mxu0 0.0
        %1098 = vmatpush.xpose.msra.mxu0 0.0
        %1099 = vmatpush.xpose.msra.mxu0 0.0
        %1100 = vmatpush.xpose.msra.mxu0 0.0
        %1101 = vmatpush.xpose.msra.mxu0 0.0
        %1102 = vmatpush.xpose.msra.mxu0 0.0
        %1103 = vmatpush.xpose.msra.mxu0 0.0
        %1104 = vmatpush.xpose.msra.mxu0 0.0
        %1105 = vmatpush.xpose.msra.mxu0 0.0
        %1106 = vmatpush.xpose.msra.mxu0 0.0
        %1107 = vmatpush.xpose.msra.mxu0 0.0
        %1108 = vmatpush.xpose.msra.mxu0 0.0
        %1109 = vmatpush.xpose.msra.mxu0 %v1093
        %1110 = vmatpush.xpose.msra.mxu0 %v1091
        %1111 = vmatmul.f32.gmra.mxu0 %v1089
        %v1112 = vpop.f32.mrf.mxu0
        %v1113 = vadd.f32 0.0, %v1112
        %1114 = vdwg.mxu0
        %v1115 = vsel %vm830, %v1113, -inf
        %1116 = vmax.xlane.f32.xlu0 %v1115
        %v1117 = vpop.xlane.xlu0 %1116
        %v1118 = vsub.f32 %v1113, %v1117
        %v1119 = vmul.f32 %v1118, 1.442695
        %v1120 = vpow.pop %v1119
        %v1121 = vsel %vm830, %v1120, 0.0
        %1122 = vadd.xlane.f32.xlu0 %v1121
        %v1123 = vpop.xlane.xlu0 %1122
        %v1124 = vrcp.pop %v1123
        %v1125 = vmul.f32 %v1120, %v1124
        %1126 = vrot.lane.b32.xlu0 %v786, 104
        %v1127 = vpop.permute.xlu0 %1126
        %1128 = vrot.lane.b32.xlu0 %v789, 104
        %v1129 = vpop.permute.xlu0 %1128
        %v1133 = vsel %vm830, %v1125, 0
        %1135 = vmatpush.msra.mxu0 0.0
        %1136 = vmatpush.msra.mxu0 0.0
        %1137 = vmatpush.msra.mxu0 0.0
        %1138 = vmatpush.msra.mxu0 0.0
        %1139 = vmatpush.msra.mxu0 0.0
        %1140 = vmatpush.msra.mxu0 0.0
        %1141 = vmatpush.msra.mxu0 0.0
        %1142 = vmatpush.msra.mxu0 0.0
        %1143 = vmatpush.msra.mxu0 0.0
        %1144 = vmatpush.msra.mxu0 0.0
        %1145 = vmatpush.msra.mxu0 0.0
        %1146 = vmatpush.msra.mxu0 0.0
        %1147 = vmatpush.msra.mxu0 0.0
        %1148 = vmatpush.msra.mxu0 0.0
        %1149 = vmatpush.msra.mxu0 %v1129
        %1150 = vmatpush.msra.mxu0 %v1127
        %1151 = vmatmul.f32.gmra.mxu0 %v1133
        %v1152 = vpop.f32.mrf.mxu0
        %v1153 = vadd.f32 0.0, %v1152
        %1154 = vdwg.mxu0
        %v1156 = vsel %vm800, %v1153, 0
        %1158 = vmatpush.msra.mxu0 0.0
        %1159 = vmatpush.msra.mxu0 0.0
        %1160 = vmatpush.msra.mxu0 0.0
        %1161 = vmatpush.msra.mxu0 0.0
        %1162 = vmatpush.msra.mxu0 0.0
        %1163 = vmatpush.msra.mxu0 0.0
        %1164 = vmatpush.msra.mxu0 0.0
        %1165 = vmatpush.msra.mxu0 0.0
        %1166 = vmatpush.msra.mxu0 0.0
        %1167 = vmatpush.msra.mxu0 0.0
        %1168 = vmatpush.msra.mxu0 0.0
        %1169 = vmatpush.msra.mxu0 0.0
        %1170 = vmatpush.msra.mxu0 0.0
        %1171 = vmatpush.msra.mxu0 0.0
        %1172 = vmatpush.msra.mxu0 0.0
        %1173 = vmatpush.msra.mxu0 %v795
        %1174 = vmatmul.f32.gmra.mxu0 %v1156
        %v1175 = vpop.f32.mrf.mxu0
        %v1176 = vadd.f32 0.0, %v1175
        %1177 = vdwg.mxu0
        %v1178 = vadd.f32 %v1082, %v1176
        %1179 = vst.msk [vmem:[%s592] sm:$0xff] %vm598, %v1178
        %s1180 = sand.u32 %s348, 1
        %s1181 = scalar_lea.sflag [#allocation4], %s1180
        %s1182 = sand.u32 %s348, 1
        %s1183 = smul.addr %s1182, 8
        %s1184 = scalar_lea.vmem [#allocation13], %s1183
        // Predicated region
        $region101: #{tpu_custom_call.1} parent=75 // pred_check
          %p1185 = pneg %p358
        $region102: #{tpu_custom_call.1} parent=75 // pred_check_branch
          %1187 = sbr.rel (%p1185) target = $region104
        $region103: #{tpu_custom_call.1} parent=75 // pred_region
          %1189 = vsyncadd %s1181, 0
          %s1190 = smul.addr %s36, 8
          %s1191 = scalar_lea.hbm %s14, %s1190
          %s1193 = sshll.u32 %s1184, 4
          %s1194 = int_to_ptr.vmem [resolvable:$true] %s1193
          %s1195 = sshll.u32 %s1191, 4
          %s1196 = int_to_ptr.hbm [resolvable:$true] %s1195
          %1198 = dma.vmem_to_hbm [thread:$0]  %s1194, 128, %s1196, %s1181
        $region104: #{tpu_custom_call.1} parent=75 // pred_fallthru
          _
      $region76: #{tpu_custom_call.1} parent=5 // pred_fallthru
        _
      %p1199 = scmp.le.s32.totalorder 2, %s31
      // Predicated region
      $region105: #{tpu_custom_call.1} parent=5 // pred_check
        %p1200 = pneg %p1199
      $region106: #{tpu_custom_call.1} parent=5 // pred_check_branch
        %1202 = sbr.rel (%p1200) target = $region108
      $region107: #{tpu_custom_call.1} parent=5 // pred_region
        %s1203 = ssub.s32 %s31, 2
        // Predicated region
        $region109: #{tpu_custom_call.1} parent=107 // pred_check
          %p1204 = pneg %p364
        $region110: #{tpu_custom_call.1} parent=107 // pred_check_branch
          %1206 = sbr.rel (%p1204) target = $region112
        $region111: #{tpu_custom_call.1} parent=107 // pred_region
          %s1207 = sand.u32 %s349, 1
          %s1208 = scalar_lea.sflag [#allocation4], %s1207
          %s1209 = sand.u32 %s349, 1
          %s1210 = smul.addr %s1209, 8
          %s1211 = scalar_lea.vmem [#allocation13], %s1210
          %1213 = dma.done %s1208, 128
        $region112: #{tpu_custom_call.1} parent=107 // pred_fallthru
          _
      $region108: #{tpu_custom_call.1} parent=5 // pred_fallthru
        _
    $region6: #{tpu_custom_call.1} parent=1 // loop_footer
      %s35 = sadd.s32 1, %s31
    $region7: #{tpu_custom_call.1} parent=1 // loop_footer_branch
      %30 = sbr.rel target = $region3
    $region8: #{tpu_custom_call.1} parent=1 // loop_exit
      _
    %1214 = vsyncpa [#allocation3], 1
    %s1215 = scalar_lea.sflag [#allocation3], 1
    %1216 = vsyncpa %s1215, 1
    %1217 = vsyncpa [#allocation6], 1
    %s1218 = scalar_lea.sflag [#allocation6], 1
    %1219 = vsyncpa %s1218, 1
    %1220 = vsyncpa [#allocation9], 1
    %1221 = vsyncpa [#allocation12], 1
    %1222 = vsyncpa [#allocation4], 1
    %s1223 = scalar_lea.sflag [#allocation4], 1
    %1224 = vsyncpa %s1223, 1

</llo_original>
